<compile_context>
chip_gen: v7x
topology: tpu7x:2x2x1
jax: 0.10.0
libtpu: 0.0.40
codegen_flags: <defaults>
</compile_context>

<pallas_src>
import functools

import jax
import jax.numpy as jnp
from jax import lax
from jax.experimental import pallas as pl
from jax.experimental.pallas import tpu as pltpu

_EPS = 1e-5  # BatchNorm1d / InstanceNorm1d default eps


# --------------------------------------------------------------------------- #
# Kernels
# --------------------------------------------------------------------------- #
def _downsample_kernel(x_ref, w10, w11, w12, b1, w20, w21, w22, b2,
                       w30, w31, w32, b3, o_ref):
    """Fused IbnBlock (conv+BN folded) + InstanceNorm + ReLU + max_pool1d(k=2).

    x_ref: (C, L)   o_ref: (C, L//2)   w*: per-tap (Cout, Cin) matrices,  b*: (Cout, 1)
    """
    f32 = jnp.float32
    C, L = x_ref.shape
    Lh = o_ref.shape[1]

    # 0/1 shift matrices: h @ s_right -> h[:, l-1] (zero pad at l=0),
    #                     h @ s_left  -> h[:, l+1] (zero pad at l=L-1).
    m = lax.broadcasted_iota(jnp.int32, (L, L), 0)
    l = lax.broadcasted_iota(jnp.int32, (L, L), 1)
    s_right = (l == m + 1).astype(f32)
    s_left = (l == m - 1).astype(f32)

    def conv3(h, wa, wb, wc, b):
        hp = jnp.dot(h, s_right, preferred_element_type=f32)      # h[:, l-1]
        hn = jnp.dot(h, s_left, preferred_element_type=f32)       # h[:, l+1]
        return (jnp.dot(wa[...], hp, preferred_element_type=f32)
                + jnp.dot(wb[...], h, preferred_element_type=f32)
                + jnp.dot(wc[...], hn, preferred_element_type=f32)
                + b[...])

    x = x_ref[...]
    h = jnp.maximum(conv3(x, w10, w11, w12, b1), 0.0)
    h = jnp.maximum(conv3(h, w20, w21, w22, b2), 0.0)
    h = conv3(h, w30, w31, w32, b3)

    y = x + h
    # InstanceNorm1d (no affine; note nn.InstanceNorm1d(256) is channel-agnostic here).
    mu = jnp.mean(y, axis=1, keepdims=True)
    var = jnp.mean((y - mu) * (y - mu), axis=1, keepdims=True)
    y = (y - mu) / jnp.sqrt(var + _EPS)
    y = jnp.maximum(y, 0.0)

    # max_pool1d(kernel=2, stride=2) via even/odd 0/1 selection matmuls.
    mp = lax.broadcasted_iota(jnp.int32, (L, Lh), 0)
    jp = lax.broadcasted_iota(jnp.int32, (L, Lh), 1)
    s_even = (mp == 2 * jp).astype(f32)
    s_odd = (mp == 2 * jp + 1).astype(f32)
    o_ref[...] = jnp.maximum(jnp.dot(y, s_even, preferred_element_type=f32),
                             jnp.dot(y, s_odd, preferred_element_type=f32))


def _attention_kernel(x_ref, scale_ref, shift_ref, wq_ref, wk_ref, wv_ref, wo_ref,
                      o_ref, *, n_heads):
    """Fused eval-BN + multi-head self-attention + output proj + residual.

    x_ref: (L, D) (already permuted), scale/shift: (1, D) eval-BN affine,
    wq/wk/wv/wo: (D, D) already transposed so y = x @ w,  o_ref: (L, D).
    """
    f32 = jnp.float32
    L, D = x_ref.shape
    dh = D // n_heads

    xb = x_ref[...] * scale_ref[...] + shift_ref[...]          # BatchNorm1d (eval)
    q = jnp.dot(xb, wq_ref[...], preferred_element_type=f32)
    k = jnp.dot(xb, wk_ref[...], preferred_element_type=f32)
    v = jnp.dot(xb, wv_ref[...], preferred_element_type=f32)
    wo = wo_ref[...]
    inv_scale = 1.0 / (float(D) ** 0.5)                        # PyTorch: / d_model**0.5

    acc = jnp.zeros((L, D), f32)
    for h in range(n_heads):
        sl = slice(h * dh, (h + 1) * dh)
        qh, kh, vh = q[:, sl], k[:, sl], v[:, sl]
        s = lax.dot_general(qh, kh, (((1,), (1,)), ((), ())),
                            preferred_element_type=f32) * inv_scale      # (L, L)
        s = s - jnp.max(s, axis=-1, keepdims=True)
        e = jnp.exp(s)
        p = e / jnp.sum(e, axis=-1, keepdims=True)
        ctx = jnp.dot(p, vh, preferred_element_type=f32)                 # (L, dh)
        acc = acc + jnp.dot(ctx, wo[sl, :], preferred_element_type=f32)  # out proj slice

    # TODO(synk): nn.Dropout(dropout) on the attention output is identity in eval mode.
    o_ref[...] = xb + acc


# --------------------------------------------------------------------------- #
# Wrappers
# --------------------------------------------------------------------------- #
def _fold_conv_bn(w, b, bn):
    """Fold eval-mode BatchNorm into conv weights; split 3-tap conv into 3 matrices."""
    s = bn['gamma'] / jnp.sqrt(bn['var'] + _EPS)
    t = bn['beta'] - bn['mean'] * s
    w0, w1, w2 = (w[:, :, k] * s[:, None] for k in range(3))
    bias = (b * s + t)[:, None]
    return w0, w1, w2, bias


def example_encoder_layer_apply(x, p, n_heads):
    N, C, L = x.shape
    assert L % 2 == 0 and C % n_heads == 0
    Lh = L // 2
    M = p['w1'].shape[0]

    w10, w11, w12, b1 = _fold_conv_bn(p['w1'], p['b1'], p['bn1'])
    w20, w21, w22, b2 = _fold_conv_bn(p['w2'], p['b2'], p['bn2'])
    w30, w31, w32, b3 = _fold_conv_bn(p['w3'], p['b3'], p['bn3'])

    def full(shape):
        return pl.BlockSpec(shape, lambda n: (0,) * len(shape))

    xd = pl.pallas_call(
        _downsample_kernel,
        out_shape=jax.ShapeDtypeStruct((N, C, Lh), jnp.float32),
        grid=(N,),
        in_specs=[
            pl.BlockSpec((None, C, L), lambda n: (n, 0, 0)),
            full((M, C)), full((M, C)), full((M, C)), full((M, 1)),
            full((M, M)), full((M, M)), full((M, M)), full((M, 1)),
            full((C, M)), full((C, M)), full((C, M)), full((C, 1)),
        ],
        out_specs=pl.BlockSpec((None, C, Lh), lambda n: (n, 0, 0)),
        compiler_params=pltpu.CompilerParams(dimension_semantics=("parallel",)),
    )(x, w10, w11, w12, b1, w20, w21, w22, b2, w30, w31, w32, b3)

    # BatchNorm1d (eval) folded to per-channel scale/shift; permutes stay in XLA.
    sa = p['bna']['gamma'] / jnp.sqrt(p['bna']['var'] + _EPS)
    ta = p['bna']['beta'] - p['bna']['mean'] * sa
    xt = jnp.transpose(xd, (0, 2, 1))                            # (N, Lh, C)

    y = pl.pallas_call(
        functools.partial(_attention_kernel, n_heads=n_heads),
        out_shape=jax.ShapeDtypeStruct((N, Lh, C), jnp.float32),
        grid=(N,),
        in_specs=[
            pl.BlockSpec((None, Lh, C), lambda n: (n, 0, 0)),
            full((1, C)), full((1, C)),
            full((C, C)), full((C, C)), full((C, C)), full((C, C)),
        ],
        out_specs=pl.BlockSpec((None, Lh, C), lambda n: (n, 0, 0)),
        compiler_params=pltpu.CompilerParams(dimension_semantics=("parallel",)),
    )(xt, sa[None, :], ta[None, :],
      p['wq'].T, p['wk'].T, p['wv'].T, p['wo'].T)

    return jnp.transpose(y, (0, 2, 1))                           # (N, C, Lh)


def example_encoder_apply(x, layer_params, n_heads):
    outs = []
    for p in layer_params:
        x = example_encoder_layer_apply(x, p, n_heads)
        outs.append(x)
    return outs


# --------------------------------------------------------------------------- #
# Pure-JAX reference (mirrors the PyTorch forward in eval mode)
# --------------------------------------------------------------------------- #
def _ref_bn(h, bn):
    s = (bn['gamma'] / jnp.sqrt(bn['var'] + _EPS))[None, :, None]
    return (h - bn['mean'][None, :, None]) * s + bn['beta'][None, :, None]


def example_encoder_layer_ref(x, p, n_heads):
    hi = lax.Precision.HIGHEST

    def conv3(h, w, b):
        L = h.shape[-1]
        hp = jnp.pad(h, ((0, 0), (0, 0), (1, 1)))
        y = sum(jnp.einsum('oc,ncl->nol', w[:, :, k], hp[:, :, k:k + L], precision=hi)
                for k in range(3))
        return y + b[None, :, None]

    h = jax.nn.relu(_ref_bn(conv3(x, p['w1'], p['b1']), p['bn1']))
    h = jax.nn.relu(_ref_bn(conv3(h, p['w2'], p['b2']), p['bn2']))
    h = _ref_bn(conv3(h, p['w3'], p['b3']), p['bn3'])
    y = x + h
    mu = y.mean(-1, keepdims=True)
    var = ((y - mu) ** 2).mean(-1, keepdims=True)
    y = jax.nn.relu((y - mu) / jnp.sqrt(var + _EPS))
    N, C, L = y.shape
    y = y.reshape(N, C, L // 2, 2).max(-1)                      # max_pool1d(k=2)

    xb = _ref_bn(y, p['bna'])
    xt = xb.transpose(0, 2, 1)                                  # (N, Lh, D)
    D = xt.shape[-1]
    dh = D // n_heads
    q = jnp.einsum('nli,oi->nlo', xt, p['wq'], precision=hi).reshape(N, -1, n_heads, dh)
    k = jnp.einsum('nli,oi->nlo', xt, p['wk'], precision=hi).reshape(N, -1, n_heads, dh)
    v = jnp.einsum('nli,oi->nlo', xt, p['wv'], precision=hi).reshape(N, -1, n_heads, dh)
    att = jnp.einsum('nqhd,nkhd->nhqk', q, k, precision=hi) / (D ** 0.5)
    att = jax.nn.softmax(att, axis=-1)
    ctx = jnp.einsum('nhqk,nkhd->nqhd', att, v, precision=hi).reshape(N, -1, D)
    out = jnp.einsum('nli,oi->nlo', ctx, p['wo'], precision=hi)
    xt = xt + out
    return xt.transpose(0, 2, 1)


def example_encoder_ref(x, layer_params, n_heads):
    outs = []
    for p in layer_params:
        x = example_encoder_layer_ref(x, p, n_heads)
        outs.append(x)
    return outs


# --------------------------------------------------------------------------- #
# Parameter init
# --------------------------------------------------------------------------- #
def _init_bn(key, c):
    k1, k2, k3, k4 = jax.random.split(key, 4)
    return dict(
        gamma=1.0 + 0.1 * jax.random.normal(k1, (c,), jnp.float32),
        beta=0.1 * jax.random.normal(k2, (c,), jnp.float32),
        mean=0.1 * jax.random.normal(k3, (c,), jnp.float32),
        var=1.0 + 0.5 * jax.random.uniform(k4, (c,), jnp.float32),
    )


def init_layer_params(key, inplates, midplates):
    ks = jax.random.split(key, 11)
    s = 0.1
    p = {
        'w1': s * jax.random.normal(ks[0], (midplates, inplates, 3), jnp.float32),
        'b1': s * jax.random.normal(ks[1], (midplates,), jnp.float32),
        'w2': s * jax.random.normal(ks[2], (midplates, midplates, 3), jnp.float32),
        'b2': s * jax.random.normal(ks[3], (midplates,), jnp.float32),
        'w3': s * jax.random.normal(ks[4], (inplates, midplates, 3), jnp.float32),
        'b3': s * jax.random.normal(ks[5], (inplates,), jnp.float32),
        'bn1': _init_bn(ks[6], midplates),
        'bn2': _init_bn(ks[7], midplates),
        'bn3': _init_bn(ks[8], inplates),
        'bna': _init_bn(ks[9], inplates),
    }
    kq, kk, kv, ko = jax.random.split(ks[10], 4)
    p['wq'] = s * jax.random.normal(kq, (inplates, inplates), jnp.float32)
    p['wk'] = s * jax.random.normal(kk, (inplates, inplates), jnp.float32)
    p['wv'] = s * jax.random.normal(kv, (inplates, inplates), jnp.float32)
    p['wo'] = s * jax.random.normal(ko, (inplates, inplates), jnp.float32)
    return p


# --------------------------------------------------------------------------- #
if __name__ == "__main__":
    key = jax.random.PRNGKey(0)
    kx, kp = jax.random.split(key)

    N, inplates, midplates, n_heads, L, n_layers = 2, 32, 16, 4, 128, 2
    x = jax.random.normal(kx, (N, inplates, L), jnp.float32)
    params = [init_layer_params(k, inplates, midplates)
              for k in jax.random.split(kp, n_layers)]

    outs = example_encoder_apply(x, params, n_heads)
    outs = jax.block_until_ready(outs)

    refs = example_encoder_ref(x, params, n_heads)
    expect_L = L
    for i, (o, r) in enumerate(zip(outs, refs)):
        expect_L //= 2
        assert o.shape == (N, inplates, expect_L) and o.dtype == jnp.float32
        assert jnp.allclose(o, r, atol=5e-3, rtol=5e-3), f"layer {i} mismatch vs reference"

    print("KERNEL_OK")
</pallas_src>

<mosaic_0001>
module attributes {stable_mosaic.version = 11 : i64} {
  func.func @_downsample_kernel(%arg0: i32, %arg1: memref<1x32x128xf32, #tpu.memory_space<vmem>>, %arg2: memref<16x32xf32, #tpu.memory_space<vmem>>, %arg3: memref<16x32xf32, #tpu.memory_space<vmem>>, %arg4: memref<16x32xf32, #tpu.memory_space<vmem>>, %arg5: memref<16x1xf32, #tpu.memory_space<vmem>>, %arg6: memref<16x16xf32, #tpu.memory_space<vmem>>, %arg7: memref<16x16xf32, #tpu.memory_space<vmem>>, %arg8: memref<16x16xf32, #tpu.memory_space<vmem>>, %arg9: memref<16x1xf32, #tpu.memory_space<vmem>>, %arg10: memref<32x16xf32, #tpu.memory_space<vmem>>, %arg11: memref<32x16xf32, #tpu.memory_space<vmem>>, %arg12: memref<32x16xf32, #tpu.memory_space<vmem>>, %arg13: memref<32x1xf32, #tpu.memory_space<vmem>>, %arg14: memref<1x32x64xf32, #tpu.memory_space<vmem>>) attributes {dimension_semantics = [#tpu.dimension_semantics<parallel>], iteration_bounds = array<i64: 2>, scalar_prefetch = 0 : i64, scratch_operands = 0 : i64, tpu.core_type = #tpu.core_type<tc>, window_params = [{transform_indices = @transform_0, window_bounds = array<i64: 1, 32, 128>}, {pipeline_mode = #tpu.pipeline_mode<synchronous>, transform_indices = @transform_1, window_bounds = array<i64: 16, 32>}, {pipeline_mode = #tpu.pipeline_mode<synchronous>, transform_indices = @transform_2, window_bounds = array<i64: 16, 32>}, {pipeline_mode = #tpu.pipeline_mode<synchronous>, transform_indices = @transform_3, window_bounds = array<i64: 16, 32>}, {pipeline_mode = #tpu.pipeline_mode<synchronous>, transform_indices = @transform_4, window_bounds = array<i64: 16, 1>}, {pipeline_mode = #tpu.pipeline_mode<synchronous>, transform_indices = @transform_5, window_bounds = array<i64: 16, 16>}, {pipeline_mode = #tpu.pipeline_mode<synchronous>, transform_indices = @transform_6, window_bounds = array<i64: 16, 16>}, {pipeline_mode = #tpu.pipeline_mode<synchronous>, transform_indices = @transform_7, window_bounds = array<i64: 16, 16>}, {pipeline_mode = #tpu.pipeline_mode<synchronous>, transform_indices = @transform_8, window_bounds = array<i64: 16, 1>}, {pipeline_mode = #tpu.pipeline_mode<synchronous>, transform_indices = @transform_9, window_bounds = array<i64: 32, 16>}, {pipeline_mode = #tpu.pipeline_mode<synchronous>, transform_indices = @transform_10, window_bounds = array<i64: 32, 16>}, {pipeline_mode = #tpu.pipeline_mode<synchronous>, transform_indices = @transform_11, window_bounds = array<i64: 32, 16>}, {pipeline_mode = #tpu.pipeline_mode<synchronous>, transform_indices = @transform_12, window_bounds = array<i64: 32, 1>}, {transform_indices = @transform_13, window_bounds = array<i64: 1, 32, 64>}]} {
    %0 = tpu.iota {dimensions = array<i32: 0>} : vector<128x128xi32>
    %1 = tpu.iota {dimensions = array<i32: 1>} : vector<128x128xi32>
    %c1_i32 = arith.constant 1 : i32
    %2 = vector.broadcast %c1_i32 : i32 to vector<128x128xi32>
    %3 = arith.addi %0, %2 : vector<128x128xi32>
    %4 = arith.cmpi eq, %1, %3 : vector<128x128xi32>
    %5 = arith.extui %4 : vector<128x128xi1> to vector<128x128xi32>
    %6 = arith.sitofp %5 : vector<128x128xi32> to vector<128x128xf32>
    %c1_i32_0 = arith.constant 1 : i32
    %7 = vector.broadcast %c1_i32_0 : i32 to vector<128x128xi32>
    %8 = arith.subi %0, %7 : vector<128x128xi32>
    %9 = arith.cmpi eq, %1, %8 : vector<128x128xi32>
    %10 = arith.extui %9 : vector<128x128xi1> to vector<128x128xi32>
    %11 = arith.sitofp %10 : vector<128x128xi32> to vector<128x128xf32>
    %c0 = arith.constant 0 : index
    %c0_1 = arith.constant 0 : index
    %c0_2 = arith.constant 0 : index
    %12 = vector.load %arg1[%c0, %c0_1, %c0_2] : memref<1x32x128xf32, #tpu.memory_space<vmem>>, vector<1x32x128xf32>
    %13 = vector.shape_cast %12 : vector<1x32x128xf32> to vector<32x128xf32>
    %cst = arith.constant dense<0.000000e+00> : vector<32x128xf32>
    %14 = tpu.matmul %13, %6, %cst {dimension_numbers = #tpu.dot_dimension_numbers<[1], [0], [0], [1], [0, 0, 1, 1], [], []>} : vector<32x128xf32>, vector<128x128xf32>, vector<32x128xf32> -> vector<32x128xf32>
    %cst_3 = arith.constant dense<0.000000e+00> : vector<32x128xf32>
    %15 = tpu.matmul %13, %11, %cst_3 {dimension_numbers = #tpu.dot_dimension_numbers<[1], [0], [0], [1], [0, 0, 1, 1], [], []>} : vector<32x128xf32>, vector<128x128xf32>, vector<32x128xf32> -> vector<32x128xf32>
    %c0_4 = arith.constant 0 : index
    %c0_5 = arith.constant 0 : index
    %16 = vector.load %arg2[%c0_4, %c0_5] : memref<16x32xf32, #tpu.memory_space<vmem>>, vector<16x32xf32>
    %cst_6 = arith.constant dense<0.000000e+00> : vector<16x128xf32>
    %17 = tpu.matmul %16, %14, %cst_6 {dimension_numbers = #tpu.dot_dimension_numbers<[1], [0], [0], [1], [0, 0, 1, 1], [], []>} : vector<16x32xf32>, vector<32x128xf32>, vector<16x128xf32> -> vector<16x128xf32>
    %c0_7 = arith.constant 0 : index
    %c0_8 = arith.constant 0 : index
    %18 = vector.load %arg3[%c0_7, %c0_8] : memref<16x32xf32, #tpu.memory_space<vmem>>, vector<16x32xf32>
    %cst_9 = arith.constant dense<0.000000e+00> : vector<16x128xf32>
    %19 = tpu.matmul %18, %13, %cst_9 {dimension_numbers = #tpu.dot_dimension_numbers<[1], [0], [0], [1], [0, 0, 1, 1], [], []>} : vector<16x32xf32>, vector<32x128xf32>, vector<16x128xf32> -> vector<16x128xf32>
    %20 = arith.addf %17, %19 : vector<16x128xf32>
    %c0_10 = arith.constant 0 : index
    %c0_11 = arith.constant 0 : index
    %21 = vector.load %arg4[%c0_10, %c0_11] : memref<16x32xf32, #tpu.memory_space<vmem>>, vector<16x32xf32>
    %cst_12 = arith.constant dense<0.000000e+00> : vector<16x128xf32>
    %22 = tpu.matmul %21, %15, %cst_12 {dimension_numbers = #tpu.dot_dimension_numbers<[1], [0], [0], [1], [0, 0, 1, 1], [], []>} : vector<16x32xf32>, vector<32x128xf32>, vector<16x128xf32> -> vector<16x128xf32>
    %23 = arith.addf %20, %22 : vector<16x128xf32>
    %c0_13 = arith.constant 0 : index
    %c0_14 = arith.constant 0 : index
    %24 = vector.load %arg5[%c0_13, %c0_14] : memref<16x1xf32, #tpu.memory_space<vmem>>, vector<16x1xf32>
    %25 = vector.broadcast %24 : vector<16x1xf32> to vector<16x128xf32>
    %26 = arith.addf %23, %25 : vector<16x128xf32>
    %cst_15 = arith.constant 0.000000e+00 : f32
    %27 = vector.broadcast %cst_15 : f32 to vector<16x128xf32>
    %28 = arith.maximumf %26, %27 : vector<16x128xf32>
    %cst_16 = arith.constant dense<0.000000e+00> : vector<16x128xf32>
    %29 = tpu.matmul %28, %6, %cst_16 {dimension_numbers = #tpu.dot_dimension_numbers<[1], [0], [0], [1], [0, 0, 1, 1], [], []>} : vector<16x128xf32>, vector<128x128xf32>, vector<16x128xf32> -> vector<16x128xf32>
    %cst_17 = arith.constant dense<0.000000e+00> : vector<16x128xf32>
    %30 = tpu.matmul %28, %11, %cst_17 {dimension_numbers = #tpu.dot_dimension_numbers<[1], [0], [0], [1], [0, 0, 1, 1], [], []>} : vector<16x128xf32>, vector<128x128xf32>, vector<16x128xf32> -> vector<16x128xf32>
    %c0_18 = arith.constant 0 : index
    %c0_19 = arith.constant 0 : index
    %31 = vector.load %arg6[%c0_18, %c0_19] : memref<16x16xf32, #tpu.memory_space<vmem>>, vector<16x16xf32>
    %cst_20 = arith.constant dense<0.000000e+00> : vector<16x128xf32>
    %32 = tpu.matmul %31, %29, %cst_20 {dimension_numbers = #tpu.dot_dimension_numbers<[1], [0], [0], [1], [0, 0, 1, 1], [], []>} : vector<16x16xf32>, vector<16x128xf32>, vector<16x128xf32> -> vector<16x128xf32>
    %c0_21 = arith.constant 0 : index
    %c0_22 = arith.constant 0 : index
    %33 = vector.load %arg7[%c0_21, %c0_22] : memref<16x16xf32, #tpu.memory_space<vmem>>, vector<16x16xf32>
    %cst_23 = arith.constant dense<0.000000e+00> : vector<16x128xf32>
    %34 = tpu.matmul %33, %28, %cst_23 {dimension_numbers = #tpu.dot_dimension_numbers<[1], [0], [0], [1], [0, 0, 1, 1], [], []>} : vector<16x16xf32>, vector<16x128xf32>, vector<16x128xf32> -> vector<16x128xf32>
    %35 = arith.addf %32, %34 : vector<16x128xf32>
    %c0_24 = arith.constant 0 : index
    %c0_25 = arith.constant 0 : index
    %36 = vector.load %arg8[%c0_24, %c0_25] : memref<16x16xf32, #tpu.memory_space<vmem>>, vector<16x16xf32>
    %cst_26 = arith.constant dense<0.000000e+00> : vector<16x128xf32>
    %37 = tpu.matmul %36, %30, %cst_26 {dimension_numbers = #tpu.dot_dimension_numbers<[1], [0], [0], [1], [0, 0, 1, 1], [], []>} : vector<16x16xf32>, vector<16x128xf32>, vector<16x128xf32> -> vector<16x128xf32>
    %38 = arith.addf %35, %37 : vector<16x128xf32>
    %c0_27 = arith.constant 0 : index
    %c0_28 = arith.constant 0 : index
    %39 = vector.load %arg9[%c0_27, %c0_28] : memref<16x1xf32, #tpu.memory_space<vmem>>, vector<16x1xf32>
    %40 = vector.broadcast %39 : vector<16x1xf32> to vector<16x128xf32>
    %41 = arith.addf %38, %40 : vector<16x128xf32>
    %cst_29 = arith.constant 0.000000e+00 : f32
    %42 = vector.broadcast %cst_29 : f32 to vector<16x128xf32>
    %43 = arith.maximumf %41, %42 : vector<16x128xf32>
    %cst_30 = arith.constant dense<0.000000e+00> : vector<16x128xf32>
    %44 = tpu.matmul %43, %6, %cst_30 {dimension_numbers = #tpu.dot_dimension_numbers<[1], [0], [0], [1], [0, 0, 1, 1], [], []>} : vector<16x128xf32>, vector<128x128xf32>, vector<16x128xf32> -> vector<16x128xf32>
    %cst_31 = arith.constant dense<0.000000e+00> : vector<16x128xf32>
    %45 = tpu.matmul %43, %11, %cst_31 {dimension_numbers = #tpu.dot_dimension_numbers<[1], [0], [0], [1], [0, 0, 1, 1], [], []>} : vector<16x128xf32>, vector<128x128xf32>, vector<16x128xf32> -> vector<16x128xf32>
    %c0_32 = arith.constant 0 : index
    %c0_33 = arith.constant 0 : index
    %46 = vector.load %arg10[%c0_32, %c0_33] : memref<32x16xf32, #tpu.memory_space<vmem>>, vector<32x16xf32>
    %cst_34 = arith.constant dense<0.000000e+00> : vector<32x128xf32>
    %47 = tpu.matmul %46, %44, %cst_34 {dimension_numbers = #tpu.dot_dimension_numbers<[1], [0], [0], [1], [0, 0, 1, 1], [], []>} : vector<32x16xf32>, vector<16x128xf32>, vector<32x128xf32> -> vector<32x128xf32>
    %c0_35 = arith.constant 0 : index
    %c0_36 = arith.constant 0 : index
    %48 = vector.load %arg11[%c0_35, %c0_36] : memref<32x16xf32, #tpu.memory_space<vmem>>, vector<32x16xf32>
    %cst_37 = arith.constant dense<0.000000e+00> : vector<32x128xf32>
    %49 = tpu.matmul %48, %43, %cst_37 {dimension_numbers = #tpu.dot_dimension_numbers<[1], [0], [0], [1], [0, 0, 1, 1], [], []>} : vector<32x16xf32>, vector<16x128xf32>, vector<32x128xf32> -> vector<32x128xf32>
    %50 = arith.addf %47, %49 : vector<32x128xf32>
    %c0_38 = arith.constant 0 : index
    %c0_39 = arith.constant 0 : index
    %51 = vector.load %arg12[%c0_38, %c0_39] : memref<32x16xf32, #tpu.memory_space<vmem>>, vector<32x16xf32>
    %cst_40 = arith.constant dense<0.000000e+00> : vector<32x128xf32>
    %52 = tpu.matmul %51, %45, %cst_40 {dimension_numbers = #tpu.dot_dimension_numbers<[1], [0], [0], [1], [0, 0, 1, 1], [], []>} : vector<32x16xf32>, vector<16x128xf32>, vector<32x128xf32> -> vector<32x128xf32>
    %53 = arith.addf %50, %52 : vector<32x128xf32>
    %c0_41 = arith.constant 0 : index
    %c0_42 = arith.constant 0 : index
    %54 = vector.load %arg13[%c0_41, %c0_42] : memref<32x1xf32, #tpu.memory_space<vmem>>, vector<32x1xf32>
    %55 = vector.broadcast %54 : vector<32x1xf32> to vector<32x128xf32>
    %56 = arith.addf %53, %55 : vector<32x128xf32>
    %57 = arith.addf %13, %56 : vector<32x128xf32>
    %cst_43 = arith.constant dense<0.000000e+00> : vector<32xf32>
    %58 = vector.multi_reduction <add>, %57, %cst_43 [1] : vector<32x128xf32> to vector<32xf32>
    %59 = vector.shape_cast %58 : vector<32xf32> to vector<32x1xf32>
    %cst_44 = arith.constant 1.280000e+02 : f32
    %60 = vector.broadcast %cst_44 : f32 to vector<32x1xf32>
    %61 = arith.divf %59, %60 : vector<32x1xf32>
    %62 = vector.broadcast %61 : vector<32x1xf32> to vector<32x128xf32>
    %63 = arith.subf %57, %62 : vector<32x128xf32>
    %64 = vector.broadcast %61 : vector<32x1xf32> to vector<32x128xf32>
    %65 = arith.subf %57, %64 : vector<32x128xf32>
    %66 = arith.mulf %63, %65 : vector<32x128xf32>
    %cst_45 = arith.constant dense<0.000000e+00> : vector<32xf32>
    %67 = vector.multi_reduction <add>, %66, %cst_45 [1] : vector<32x128xf32> to vector<32xf32>
    %68 = vector.shape_cast %67 : vector<32xf32> to vector<32x1xf32>
    %cst_46 = arith.constant 1.280000e+02 : f32
    %69 = vector.broadcast %cst_46 : f32 to vector<32x1xf32>
    %70 = arith.divf %68, %69 : vector<32x1xf32>
    %71 = vector.broadcast %61 : vector<32x1xf32> to vector<32x128xf32>
    %72 = arith.subf %57, %71 : vector<32x128xf32>
    %cst_47 = arith.constant 9.99999974E-6 : f32
    %73 = vector.broadcast %cst_47 : f32 to vector<32x1xf32>
    %74 = arith.addf %70, %73 : vector<32x1xf32>
    %75 = math.sqrt %74 : vector<32x1xf32>
    %76 = vector.broadcast %75 : vector<32x1xf32> to vector<32x128xf32>
    %77 = arith.divf %72, %76 : vector<32x128xf32>
    %cst_48 = arith.constant 0.000000e+00 : f32
    %78 = vector.broadcast %cst_48 : f32 to vector<32x128xf32>
    %79 = arith.maximumf %77, %78 : vector<32x128xf32>
    %80 = tpu.iota {dimensions = array<i32: 0>} : vector<128x64xi32>
    %81 = tpu.iota {dimensions = array<i32: 1>} : vector<128x64xi32>
    %c2_i32 = arith.constant 2 : i32
    %82 = vector.broadcast %c2_i32 : i32 to vector<128x64xi32>
    %83 = arith.muli %82, %81 : vector<128x64xi32>
    %84 = arith.cmpi eq, %80, %83 : vector<128x64xi32>
    %85 = arith.extui %84 : vector<128x64xi1> to vector<128x64xi32>
    %86 = arith.sitofp %85 : vector<128x64xi32> to vector<128x64xf32>
    %c2_i32_49 = arith.constant 2 : i32
    %87 = vector.broadcast %c2_i32_49 : i32 to vector<128x64xi32>
    %88 = arith.muli %87, %81 : vector<128x64xi32>
    %c1_i32_50 = arith.constant 1 : i32
    %89 = vector.broadcast %c1_i32_50 : i32 to vector<128x64xi32>
    %90 = arith.addi %88, %89 : vector<128x64xi32>
    %91 = arith.cmpi eq, %80, %90 : vector<128x64xi32>
    %92 = arith.extui %91 : vector<128x64xi1> to vector<128x64xi32>
    %93 = arith.sitofp %92 : vector<128x64xi32> to vector<128x64xf32>
    %cst_51 = arith.constant dense<0.000000e+00> : vector<32x64xf32>
    %94 = tpu.matmul %79, %86, %cst_51 {dimension_numbers = #tpu.dot_dimension_numbers<[1], [0], [0], [1], [0, 0, 1, 1], [], []>} : vector<32x128xf32>, vector<128x64xf32>, vector<32x64xf32> -> vector<32x64xf32>
    %cst_52 = arith.constant dense<0.000000e+00> : vector<32x64xf32>
    %95 = tpu.matmul %79, %93, %cst_52 {dimension_numbers = #tpu.dot_dimension_numbers<[1], [0], [0], [1], [0, 0, 1, 1], [], []>} : vector<32x128xf32>, vector<128x64xf32>, vector<32x64xf32> -> vector<32x64xf32>
    %96 = arith.maximumf %94, %95 : vector<32x64xf32>
    %c0_53 = arith.constant 0 : index
    %c0_54 = arith.constant 0 : index
    %c0_55 = arith.constant 0 : index
    %97 = vector.load %arg14[%c0_53, %c0_54, %c0_55] : memref<1x32x64xf32, #tpu.memory_space<vmem>>, vector<1x32x64xf32>
    %98 = vector.shape_cast %97 : vector<1x32x64xf32> to vector<32x64xf32>
    %99 = vector.shape_cast %96 : vector<32x64xf32> to vector<1x32x64xf32>
    tpu.vector_store %arg14[%c0_53, %c0_54, %c0_55], %99 {strides = array<i32>} : memref<1x32x64xf32, #tpu.memory_space<vmem>>, vector<1x32x64xf32>,
    return
  }
  func.func @transform_0(%arg0: i32) -> (i32, i32, i32) {
    %c0_i32 = arith.constant 0 : i32
    %c0_i32_0 = arith.constant 0 : i32
    %c0_i32_1 = arith.constant 0 : i32
    return %arg0, %c0_i32, %c0_i32_0 : i32, i32, i32
  }
  func.func @transform_1(%arg0: i32) -> (i32, i32) {
    %c0_i32 = arith.constant 0 : i32
    %c0_i32_0 = arith.constant 0 : i32
    %c0_i32_1 = arith.constant 0 : i32
    return %c0_i32, %c0_i32_0 : i32, i32
  }
  func.func @transform_2(%arg0: i32) -> (i32, i32) {
    %c0_i32 = arith.constant 0 : i32
    %c0_i32_0 = arith.constant 0 : i32
    %c0_i32_1 = arith.constant 0 : i32
    return %c0_i32, %c0_i32_0 : i32, i32
  }
  func.func @transform_3(%arg0: i32) -> (i32, i32) {
    %c0_i32 = arith.constant 0 : i32
    %c0_i32_0 = arith.constant 0 : i32
    %c0_i32_1 = arith.constant 0 : i32
    return %c0_i32, %c0_i32_0 : i32, i32
  }
  func.func @transform_4(%arg0: i32) -> (i32, i32) {
    %c0_i32 = arith.constant 0 : i32
    %c0_i32_0 = arith.constant 0 : i32
    %c0_i32_1 = arith.constant 0 : i32
    return %c0_i32, %c0_i32_0 : i32, i32
  }
  func.func @transform_5(%arg0: i32) -> (i32, i32) {
    %c0_i32 = arith.constant 0 : i32
    %c0_i32_0 = arith.constant 0 : i32
    %c0_i32_1 = arith.constant 0 : i32
    return %c0_i32, %c0_i32_0 : i32, i32
  }
  func.func @transform_6(%arg0: i32) -> (i32, i32) {
    %c0_i32 = arith.constant 0 : i32
    %c0_i32_0 = arith.constant 0 : i32
    %c0_i32_1 = arith.constant 0 : i32
    return %c0_i32, %c0_i32_0 : i32, i32
  }
  func.func @transform_7(%arg0: i32) -> (i32, i32) {
    %c0_i32 = arith.constant 0 : i32
    %c0_i32_0 = arith.constant 0 : i32
    %c0_i32_1 = arith.constant 0 : i32
    return %c0_i32, %c0_i32_0 : i32, i32
  }
  func.func @transform_8(%arg0: i32) -> (i32, i32) {
    %c0_i32 = arith.constant 0 : i32
    %c0_i32_0 = arith.constant 0 : i32
    %c0_i32_1 = arith.constant 0 : i32
    return %c0_i32, %c0_i32_0 : i32, i32
  }
  func.func @transform_9(%arg0: i32) -> (i32, i32) {
    %c0_i32 = arith.constant 0 : i32
    %c0_i32_0 = arith.constant 0 : i32
    %c0_i32_1 = arith.constant 0 : i32
    return %c0_i32, %c0_i32_0 : i32, i32
  }
  func.func @transform_10(%arg0: i32) -> (i32, i32) {
    %c0_i32 = arith.constant 0 : i32
    %c0_i32_0 = arith.constant 0 : i32
    %c0_i32_1 = arith.constant 0 : i32
    return %c0_i32, %c0_i32_0 : i32, i32
  }
  func.func @transform_11(%arg0: i32) -> (i32, i32) {
    %c0_i32 = arith.constant 0 : i32
    %c0_i32_0 = arith.constant 0 : i32
    %c0_i32_1 = arith.constant 0 : i32
    return %c0_i32, %c0_i32_0 : i32, i32
  }
  func.func @transform_12(%arg0: i32) -> (i32, i32) {
    %c0_i32 = arith.constant 0 : i32
    %c0_i32_0 = arith.constant 0 : i32
    %c0_i32_1 = arith.constant 0 : i32
    return %c0_i32, %c0_i32_0 : i32, i32
  }
  func.func @transform_13(%arg0: i32) -> (i32, i32, i32) {
    %c0_i32 = arith.constant 0 : i32
    %c0_i32_0 = arith.constant 0 : i32
    %c0_i32_1 = arith.constant 0 : i32
    return %arg0, %c0_i32, %c0_i32_0 : i32, i32, i32
  }
}

</mosaic_0001>

<llo_original>
// kernel: tpu_custom_call.1
$region0: #{tpu_custom_call.1}
  #allocation0 [shape = 'u32[]', space=smem, size = 0x4, offset = 0x4, fixed_abs, tag = 'smem constant byte address 0x4 - core index']
  #allocation1 [shape = 'u32[144,128]{1,0:T(1,128)}', space=vmem, size = 0x12000, scoped, tag = 'internal scratch']
  %s0 = inlined_call_operand.vmem [shape: f32[2,32,128], index: 0, kind: input, shape index: {}]
  %s1 = inlined_call_operand.vmem [shape: f32[16,32], index: 1, kind: input, shape index: {}]
  %s2 = inlined_call_operand.vmem [shape: f32[16,32], index: 2, kind: input, shape index: {}]
  %s3 = inlined_call_operand.vmem [shape: f32[16,32], index: 3, kind: input, shape index: {}]
  %s4 = inlined_call_operand.vmem [shape: f32[16,1], index: 4, kind: input, shape index: {}]
  %s5 = inlined_call_operand.vmem [shape: f32[16,16], index: 5, kind: input, shape index: {}]
  %s6 = inlined_call_operand.vmem [shape: f32[16,16], index: 6, kind: input, shape index: {}]
  %s7 = inlined_call_operand.vmem [shape: f32[16,16], index: 7, kind: input, shape index: {}]
  %s8 = inlined_call_operand.vmem [shape: f32[16,1], index: 8, kind: input, shape index: {}]
  %s9 = inlined_call_operand.vmem [shape: f32[32,16], index: 9, kind: input, shape index: {}]
  %s10 = inlined_call_operand.vmem [shape: f32[32,16], index: 10, kind: input, shape index: {}]
  %s11 = inlined_call_operand.vmem [shape: f32[32,16], index: 11, kind: input, shape index: {}]
  %s12 = inlined_call_operand.vmem [shape: f32[32,1], index: 12, kind: input, shape index: {}]
  %s13 = inlined_call_operand.hbm [shape: f32[2,32,64], index: 13, kind: output, shape index: {}]
  %s14 = sld [smem:[#allocation0]]
  $region85: #{tpu_custom_call.1} parent=0
    _
  %s16 = ssub.s32 1, %s14
  %s17 = scalar_select 0, %s16, %s14
  $region1: #{tpu_custom_call.1} parent=0
    #allocation2 [shape = 'u8[32768]{0}', space=vmem, size = 0x8000, scoped, tag = 'output window, operand 0']
    #allocation3 [shape = 's32[2]{0}', space=sflag, size = 0x8, scoped, tag = 'scoped memory for tpu_custom_call.1']
    %18 = vsyncpa [#allocation3], 0
    %s19 = scalar_lea.sflag [#allocation3], 1
    %20 = vsyncpa %s19, 0
    loop: start=0, step=1, limit=4
    $region2: #{tpu_custom_call.1} parent=1 // loop_pre_header
      _
    $region3: #{tpu_custom_call.1} parent=1 // loop_header
      %s22 = sphi 0, %s26
      %p23 = scmp.ge.s32.totalorder %s22, 4
      %s32 = sphi 0, %s34
      %s35 = sphi 0, %s32
      %s36 = sphi 0, %s35
      %s52 = sphi 0, %s36
      %s56 = sphi 0, %s56
      %s58 = sphi 0, %s56
      %s59 = sphi 0, %s58
      %s73 = sphi 0, %s59
      %s77 = sphi 0, %s77
      %s79 = sphi 0, %s77
      %s80 = sphi 0, %s79
      %s94 = sphi 0, %s80
      %s98 = sphi 0, %s98
      %s100 = sphi 0, %s98
      %s101 = sphi 0, %s100
      %s115 = sphi 0, %s101
      %s119 = sphi 0, %s119
      %s121 = sphi 0, %s119
      %s122 = sphi 0, %s121
      %s136 = sphi 0, %s122
      %s140 = sphi 0, %s140
      %s142 = sphi 0, %s140
      %s143 = sphi 0, %s142
      %s157 = sphi 0, %s143
      %s161 = sphi 0, %s161
      %s163 = sphi 0, %s161
      %s164 = sphi 0, %s163
      %s178 = sphi 0, %s164
      %s182 = sphi 0, %s182
      %s184 = sphi 0, %s182
      %s185 = sphi 0, %s184
      %s199 = sphi 0, %s185
      %s203 = sphi 0, %s203
      %s205 = sphi 0, %s203
      %s206 = sphi 0, %s205
      %s220 = sphi 0, %s206
      %s224 = sphi 0, %s224
      %s226 = sphi 0, %s224
      %s227 = sphi 0, %s226
      %s241 = sphi 0, %s227
      %s245 = sphi 0, %s245
      %s247 = sphi 0, %s245
      %s248 = sphi 0, %s247
      %s262 = sphi 0, %s248
      %s266 = sphi 0, %s266
      %s268 = sphi 0, %s266
      %s269 = sphi 0, %s268
      %s283 = sphi 0, %s269
      %s287 = sphi 0, %s287
      %s289 = sphi 0, %s287
      %s290 = sphi 0, %s289
      %s304 = sphi 0, %s290
      %s310 = sphi 0, %s312
      %s313 = sphi 0, %s310
      %s314 = sphi 0, %s313
      %s330 = sphi 0, %s314
    $region4: #{tpu_custom_call.1} parent=1 // loop_header_branch
      %25 = sbr.rel (%p23) target = $region8
    $region5: #{tpu_custom_call.1} parent=1 // loop_body
      %s27 = ssub.s32 %s22, 1
      %s28 = ssub.s32 %s22, 2
      %s29 = sadd.s32 %s22, 1
      %s30 = ssub.s32 %s22, %s29
      %p31 = scmp.eq.s32.totalorder %s30, 0
      %s33 = sadd.s32 %s32, 1
      %s34 = scalar_select %p31, %s32, %s33
      %p37 = pneg %p31
      %p38 = scmp.eq.s32.totalorder %s22, 1
      %p39 = por %p37, %p38
      %p40 = scmp.ne.s32.totalorder %s32, %s35
      %p41 = scmp.eq.s32.totalorder %s22, 0
      %p42 = por %p40, %p41
      %p43 = scmp.ne.s32.totalorder %s32, %s35
      %p44 = scmp.eq.s32.totalorder %s27, 1
      %p45 = por %p43, %p44
      %p46 = scmp.ne.s32.totalorder %s35, %s36
      %p47 = scmp.eq.s32.totalorder %s27, 0
      %p48 = por %p46, %p47
      %p49 = scmp.ne.s32.totalorder %s35, %s36
      %p50 = scmp.eq.s32.totalorder %s28, 1
      %p51 = por %p49, %p50
      %p53 = scmp.ne.s32.totalorder %s36, %s52
      %p54 = scmp.eq.s32.totalorder %s28, 0
      %p55 = por %p53, %p54
      %s57 = sadd.s32 %s56, 1
      %p60 = scmp.eq.s32.totalorder %s22, 1
      %p61 = scmp.ne.s32.totalorder %s56, %s58
      %p62 = scmp.eq.s32.totalorder %s22, 0
      %p63 = por %p61, %p62
      %p64 = scmp.ne.s32.totalorder %s56, %s58
      %p65 = scmp.eq.s32.totalorder %s27, 1
      %p66 = por %p64, %p65
      %p67 = scmp.ne.s32.totalorder %s58, %s59
      %p68 = scmp.eq.s32.totalorder %s27, 0
      %p69 = por %p67, %p68
      %p70 = scmp.ne.s32.totalorder %s58, %s59
      %p71 = scmp.eq.s32.totalorder %s28, 1
      %p72 = por %p70, %p71
      %p74 = scmp.ne.s32.totalorder %s59, %s73
      %p75 = scmp.eq.s32.totalorder %s28, 0
      %p76 = por %p74, %p75
      %s78 = sadd.s32 %s77, 1
      %p81 = scmp.eq.s32.totalorder %s22, 1
      %p82 = scmp.ne.s32.totalorder %s77, %s79
      %p83 = scmp.eq.s32.totalorder %s22, 0
      %p84 = por %p82, %p83
      %p85 = scmp.ne.s32.totalorder %s77, %s79
      %p86 = scmp.eq.s32.totalorder %s27, 1
      %p87 = por %p85, %p86
      %p88 = scmp.ne.s32.totalorder %s79, %s80
      %p89 = scmp.eq.s32.totalorder %s27, 0
      %p90 = por %p88, %p89
      %p91 = scmp.ne.s32.totalorder %s79, %s80
      %p92 = scmp.eq.s32.totalorder %s28, 1
      %p93 = por %p91, %p92
      %p95 = scmp.ne.s32.totalorder %s80, %s94
      %p96 = scmp.eq.s32.totalorder %s28, 0
      %p97 = por %p95, %p96
      %s99 = sadd.s32 %s98, 1
      %p102 = scmp.eq.s32.totalorder %s22, 1
      %p103 = scmp.ne.s32.totalorder %s98, %s100
      %p104 = scmp.eq.s32.totalorder %s22, 0
      %p105 = por %p103, %p104
      %p106 = scmp.ne.s32.totalorder %s98, %s100
      %p107 = scmp.eq.s32.totalorder %s27, 1
      %p108 = por %p106, %p107
      %p109 = scmp.ne.s32.totalorder %s100, %s101
      %p110 = scmp.eq.s32.totalorder %s27, 0
      %p111 = por %p109, %p110
      %p112 = scmp.ne.s32.totalorder %s100, %s101
      %p113 = scmp.eq.s32.totalorder %s28, 1
      %p114 = por %p112, %p113
      %p116 = scmp.ne.s32.totalorder %s101, %s115
      %p117 = scmp.eq.s32.totalorder %s28, 0
      %p118 = por %p116, %p117
      %s120 = sadd.s32 %s119, 1
      %p123 = scmp.eq.s32.totalorder %s22, 1
      %p124 = scmp.ne.s32.totalorder %s119, %s121
      %p125 = scmp.eq.s32.totalorder %s22, 0
      %p126 = por %p124, %p125
      %p127 = scmp.ne.s32.totalorder %s119, %s121
      %p128 = scmp.eq.s32.totalorder %s27, 1
      %p129 = por %p127, %p128
      %p130 = scmp.ne.s32.totalorder %s121, %s122
      %p131 = scmp.eq.s32.totalorder %s27, 0
      %p132 = por %p130, %p131
      %p133 = scmp.ne.s32.totalorder %s121, %s122
      %p134 = scmp.eq.s32.totalorder %s28, 1
      %p135 = por %p133, %p134
      %p137 = scmp.ne.s32.totalorder %s122, %s136
      %p138 = scmp.eq.s32.totalorder %s28, 0
      %p139 = por %p137, %p138
      %s141 = sadd.s32 %s140, 1
      %p144 = scmp.eq.s32.totalorder %s22, 1
      %p145 = scmp.ne.s32.totalorder %s140, %s142
      %p146 = scmp.eq.s32.totalorder %s22, 0
      %p147 = por %p145, %p146
      %p148 = scmp.ne.s32.totalorder %s140, %s142
      %p149 = scmp.eq.s32.totalorder %s27, 1
      %p150 = por %p148, %p149
      %p151 = scmp.ne.s32.totalorder %s142, %s143
      %p152 = scmp.eq.s32.totalorder %s27, 0
      %p153 = por %p151, %p152
      %p154 = scmp.ne.s32.totalorder %s142, %s143
      %p155 = scmp.eq.s32.totalorder %s28, 1
      %p156 = por %p154, %p155
      %p158 = scmp.ne.s32.totalorder %s143, %s157
      %p159 = scmp.eq.s32.totalorder %s28, 0
      %p160 = por %p158, %p159
      %s162 = sadd.s32 %s161, 1
      %p165 = scmp.eq.s32.totalorder %s22, 1
      %p166 = scmp.ne.s32.totalorder %s161, %s163
      %p167 = scmp.eq.s32.totalorder %s22, 0
      %p168 = por %p166, %p167
      %p169 = scmp.ne.s32.totalorder %s161, %s163
      %p170 = scmp.eq.s32.totalorder %s27, 1
      %p171 = por %p169, %p170
      %p172 = scmp.ne.s32.totalorder %s163, %s164
      %p173 = scmp.eq.s32.totalorder %s27, 0
      %p174 = por %p172, %p173
      %p175 = scmp.ne.s32.totalorder %s163, %s164
      %p176 = scmp.eq.s32.totalorder %s28, 1
      %p177 = por %p175, %p176
      %p179 = scmp.ne.s32.totalorder %s164, %s178
      %p180 = scmp.eq.s32.totalorder %s28, 0
      %p181 = por %p179, %p180
      %s183 = sadd.s32 %s182, 1
      %p186 = scmp.eq.s32.totalorder %s22, 1
      %p187 = scmp.ne.s32.totalorder %s182, %s184
      %p188 = scmp.eq.s32.totalorder %s22, 0
      %p189 = por %p187, %p188
      %p190 = scmp.ne.s32.totalorder %s182, %s184
      %p191 = scmp.eq.s32.totalorder %s27, 1
      %p192 = por %p190, %p191
      %p193 = scmp.ne.s32.totalorder %s184, %s185
      %p194 = scmp.eq.s32.totalorder %s27, 0
      %p195 = por %p193, %p194
      %p196 = scmp.ne.s32.totalorder %s184, %s185
      %p197 = scmp.eq.s32.totalorder %s28, 1
      %p198 = por %p196, %p197
      %p200 = scmp.ne.s32.totalorder %s185, %s199
      %p201 = scmp.eq.s32.totalorder %s28, 0
      %p202 = por %p200, %p201
      %s204 = sadd.s32 %s203, 1
      %p207 = scmp.eq.s32.totalorder %s22, 1
      %p208 = scmp.ne.s32.totalorder %s203, %s205
      %p209 = scmp.eq.s32.totalorder %s22, 0
      %p210 = por %p208, %p209
      %p211 = scmp.ne.s32.totalorder %s203, %s205
      %p212 = scmp.eq.s32.totalorder %s27, 1
      %p213 = por %p211, %p212
      %p214 = scmp.ne.s32.totalorder %s205, %s206
      %p215 = scmp.eq.s32.totalorder %s27, 0
      %p216 = por %p214, %p215
      %p217 = scmp.ne.s32.totalorder %s205, %s206
      %p218 = scmp.eq.s32.totalorder %s28, 1
      %p219 = por %p217, %p218
      %p221 = scmp.ne.s32.totalorder %s206, %s220
      %p222 = scmp.eq.s32.totalorder %s28, 0
      %p223 = por %p221, %p222
      %s225 = sadd.s32 %s224, 1
      %p228 = scmp.eq.s32.totalorder %s22, 1
      %p229 = scmp.ne.s32.totalorder %s224, %s226
      %p230 = scmp.eq.s32.totalorder %s22, 0
      %p231 = por %p229, %p230
      %p232 = scmp.ne.s32.totalorder %s224, %s226
      %p233 = scmp.eq.s32.totalorder %s27, 1
      %p234 = por %p232, %p233
      %p235 = scmp.ne.s32.totalorder %s226, %s227
      %p236 = scmp.eq.s32.totalorder %s27, 0
      %p237 = por %p235, %p236
      %p238 = scmp.ne.s32.totalorder %s226, %s227
      %p239 = scmp.eq.s32.totalorder %s28, 1
      %p240 = por %p238, %p239
      %p242 = scmp.ne.s32.totalorder %s227, %s241
      %p243 = scmp.eq.s32.totalorder %s28, 0
      %p244 = por %p242, %p243
      %s246 = sadd.s32 %s245, 1
      %p249 = scmp.eq.s32.totalorder %s22, 1
      %p250 = scmp.ne.s32.totalorder %s245, %s247
      %p251 = scmp.eq.s32.totalorder %s22, 0
      %p252 = por %p250, %p251
      %p253 = scmp.ne.s32.totalorder %s245, %s247
      %p254 = scmp.eq.s32.totalorder %s27, 1
      %p255 = por %p253, %p254
      %p256 = scmp.ne.s32.totalorder %s247, %s248
      %p257 = scmp.eq.s32.totalorder %s27, 0
      %p258 = por %p256, %p257
      %p259 = scmp.ne.s32.totalorder %s247, %s248
      %p260 = scmp.eq.s32.totalorder %s28, 1
      %p261 = por %p259, %p260
      %p263 = scmp.ne.s32.totalorder %s248, %s262
      %p264 = scmp.eq.s32.totalorder %s28, 0
      %p265 = por %p263, %p264
      %s267 = sadd.s32 %s266, 1
      %p270 = scmp.eq.s32.totalorder %s22, 1
      %p271 = scmp.ne.s32.totalorder %s266, %s268
      %p272 = scmp.eq.s32.totalorder %s22, 0
      %p273 = por %p271, %p272
      %p274 = scmp.ne.s32.totalorder %s266, %s268
      %p275 = scmp.eq.s32.totalorder %s27, 1
      %p276 = por %p274, %p275
      %p277 = scmp.ne.s32.totalorder %s268, %s269
      %p278 = scmp.eq.s32.totalorder %s27, 0
      %p279 = por %p277, %p278
      %p280 = scmp.ne.s32.totalorder %s268, %s269
      %p281 = scmp.eq.s32.totalorder %s28, 1
      %p282 = por %p280, %p281
      %p284 = scmp.ne.s32.totalorder %s269, %s283
      %p285 = scmp.eq.s32.totalorder %s28, 0
      %p286 = por %p284, %p285
      %s288 = sadd.s32 %s287, 1
      %p291 = scmp.eq.s32.totalorder %s22, 1
      %p292 = scmp.ne.s32.totalorder %s287, %s289
      %p293 = scmp.eq.s32.totalorder %s22, 0
      %p294 = por %p292, %p293
      %p295 = scmp.ne.s32.totalorder %s287, %s289
      %p296 = scmp.eq.s32.totalorder %s27, 1
      %p297 = por %p295, %p296
      %p298 = scmp.ne.s32.totalorder %s289, %s290
      %p299 = scmp.eq.s32.totalorder %s27, 0
      %p300 = por %p298, %p299
      %p301 = scmp.ne.s32.totalorder %s289, %s290
      %p302 = scmp.eq.s32.totalorder %s28, 1
      %p303 = por %p301, %p302
      %p305 = scmp.ne.s32.totalorder %s290, %s304
      %p306 = scmp.eq.s32.totalorder %s28, 0
      %p307 = por %p305, %p306
      %s308 = ssub.s32 %s22, %s29
      %p309 = scmp.eq.s32.totalorder %s308, 0
      %s311 = sadd.s32 %s310, 1
      %s312 = scalar_select %p309, %s310, %s311
      %p315 = pneg %p309
      %p316 = scmp.eq.s32.totalorder %s22, 1
      %p317 = por %p315, %p316
      %p318 = scmp.ne.s32.totalorder %s310, %s313
      %p319 = scmp.eq.s32.totalorder %s22, 0
      %p320 = por %p318, %p319
      %p321 = scmp.ne.s32.totalorder %s310, %s313
      %p322 = scmp.eq.s32.totalorder %s27, 1
      %p323 = por %p321, %p322
      %p324 = scmp.ne.s32.totalorder %s313, %s314
      %p325 = scmp.eq.s32.totalorder %s27, 0
      %p326 = por %p324, %p325
      %p327 = scmp.ne.s32.totalorder %s313, %s314
      %p328 = scmp.eq.s32.totalorder %s28, 1
      %p329 = por %p327, %p328
      %p331 = scmp.ne.s32.totalorder %s314, %s330
      %p332 = scmp.eq.s32.totalorder %s28, 0
      %p333 = por %p331, %p332
      %p334 = scmp.le.s32.totalorder 1, %s22
      %p335 = scmp.lt.s32.totalorder %s22, 3
      %p336 = pnand %p334, %p335
      %p337 = pneg %p336
      // Predicated region
      $region9: #{tpu_custom_call.1} parent=5 // pred_check
        _
      $region10: #{tpu_custom_call.1} parent=5 // pred_check_branch
        %339 = sbr.rel (%p336) target = $region12
      $region11: #{tpu_custom_call.1} parent=5 // pred_region
        %s340 = ssub.s32 %s22, 1
        // Predicated region
        $region13: #{tpu_custom_call.1} parent=11 // pred_check
          %p341 = pneg %p69
        $region14: #{tpu_custom_call.1} parent=11 // pred_check_branch
          %343 = sbr.rel (%p341) target = $region16
        $region15: #{tpu_custom_call.1} parent=11 // pred_region
          _
        $region16: #{tpu_custom_call.1} parent=11 // pred_fallthru
          _
        // Predicated region
        $region17: #{tpu_custom_call.1} parent=11 // pred_check
          %p344 = pneg %p90
        $region18: #{tpu_custom_call.1} parent=11 // pred_check_branch
          %346 = sbr.rel (%p344) target = $region20
        $region19: #{tpu_custom_call.1} parent=11 // pred_region
          _
        $region20: #{tpu_custom_call.1} parent=11 // pred_fallthru
          _
        // Predicated region
        $region21: #{tpu_custom_call.1} parent=11 // pred_check
          %p347 = pneg %p111
        $region22: #{tpu_custom_call.1} parent=11 // pred_check_branch
          %349 = sbr.rel (%p347) target = $region24
        $region23: #{tpu_custom_call.1} parent=11 // pred_region
          _
        $region24: #{tpu_custom_call.1} parent=11 // pred_fallthru
          _
        // Predicated region
        $region25: #{tpu_custom_call.1} parent=11 // pred_check
          %p350 = pneg %p132
        $region26: #{tpu_custom_call.1} parent=11 // pred_check_branch
          %352 = sbr.rel (%p350) target = $region28
        $region27: #{tpu_custom_call.1} parent=11 // pred_region
          _
        $region28: #{tpu_custom_call.1} parent=11 // pred_fallthru
          _
        // Predicated region
        $region29: #{tpu_custom_call.1} parent=11 // pred_check
          %p353 = pneg %p153
        $region30: #{tpu_custom_call.1} parent=11 // pred_check_branch
          %355 = sbr.rel (%p353) target = $region32
        $region31: #{tpu_custom_call.1} parent=11 // pred_region
          _
        $region32: #{tpu_custom_call.1} parent=11 // pred_fallthru
          _
        // Predicated region
        $region33: #{tpu_custom_call.1} parent=11 // pred_check
          %p356 = pneg %p174
        $region34: #{tpu_custom_call.1} parent=11 // pred_check_branch
          %358 = sbr.rel (%p356) target = $region36
        $region35: #{tpu_custom_call.1} parent=11 // pred_region
          _
        $region36: #{tpu_custom_call.1} parent=11 // pred_fallthru
          _
        // Predicated region
        $region37: #{tpu_custom_call.1} parent=11 // pred_check
          %p359 = pneg %p195
        $region38: #{tpu_custom_call.1} parent=11 // pred_check_branch
          %361 = sbr.rel (%p359) target = $region40
        $region39: #{tpu_custom_call.1} parent=11 // pred_region
          _
        $region40: #{tpu_custom_call.1} parent=11 // pred_fallthru
          _
        // Predicated region
        $region41: #{tpu_custom_call.1} parent=11 // pred_check
          %p362 = pneg %p216
        $region42: #{tpu_custom_call.1} parent=11 // pred_check_branch
          %364 = sbr.rel (%p362) target = $region44
        $region43: #{tpu_custom_call.1} parent=11 // pred_region
          _
        $region44: #{tpu_custom_call.1} parent=11 // pred_fallthru
          _
        // Predicated region
        $region45: #{tpu_custom_call.1} parent=11 // pred_check
          %p365 = pneg %p237
        $region46: #{tpu_custom_call.1} parent=11 // pred_check_branch
          %367 = sbr.rel (%p365) target = $region48
        $region47: #{tpu_custom_call.1} parent=11 // pred_region
          _
        $region48: #{tpu_custom_call.1} parent=11 // pred_fallthru
          _
        // Predicated region
        $region49: #{tpu_custom_call.1} parent=11 // pred_check
          %p368 = pneg %p258
        $region50: #{tpu_custom_call.1} parent=11 // pred_check_branch
          %370 = sbr.rel (%p368) target = $region52
        $region51: #{tpu_custom_call.1} parent=11 // pred_region
          _
        $region52: #{tpu_custom_call.1} parent=11 // pred_fallthru
          _
        // Predicated region
        $region53: #{tpu_custom_call.1} parent=11 // pred_check
          %p371 = pneg %p279
        $region54: #{tpu_custom_call.1} parent=11 // pred_check_branch
          %373 = sbr.rel (%p371) target = $region56
        $region55: #{tpu_custom_call.1} parent=11 // pred_region
          _
        $region56: #{tpu_custom_call.1} parent=11 // pred_fallthru
          _
        // Predicated region
        $region57: #{tpu_custom_call.1} parent=11 // pred_check
          %p374 = pneg %p300
        $region58: #{tpu_custom_call.1} parent=11 // pred_check_branch
          %376 = sbr.rel (%p374) target = $region60
        $region59: #{tpu_custom_call.1} parent=11 // pred_region
          _
        $region60: #{tpu_custom_call.1} parent=11 // pred_fallthru
          _
      $region12: #{tpu_custom_call.1} parent=5 // pred_fallthru
        _
      %p377 = scmp.lt.s32.totalorder %s22, 2
      // Predicated region
      $region61: #{tpu_custom_call.1} parent=5 // pred_check
        %p378 = pneg %p377
      $region62: #{tpu_custom_call.1} parent=5 // pred_check_branch
        %380 = sbr.rel (%p378) target = $region64
      $region63: #{tpu_custom_call.1} parent=5 // pred_region
        // Predicated region
        $region65: #{tpu_custom_call.1} parent=63 // pred_check
          %p381 = pneg %p42
        $region66: #{tpu_custom_call.1} parent=63 // pred_check_branch
          %383 = sbr.rel (%p381) target = $region68
        $region67: #{tpu_custom_call.1} parent=63 // pred_region
          %p384 = scmp.lt.s32.totalorder %s22, 1
          %s385 = scalar_select %p384, %s22, 1
          %s386 = smul.addr %s385, 4
          %s387 = smul.addr %s386, 8
          %s388 = scalar_lea.vmem %s0, %s387
        $region68: #{tpu_custom_call.1} parent=63 // pred_fallthru
          _
      $region64: #{tpu_custom_call.1} parent=5 // pred_fallthru
        _
      %p389 = scmp.le.s32.totalorder 1, %s22
      %p390 = scmp.lt.s32.totalorder %s22, 3
      %p391 = pnand %p389, %p390
      %p392 = pneg %p391
      // Predicated region
      $region69: #{tpu_custom_call.1} parent=5 // pred_check
        _
      $region70: #{tpu_custom_call.1} parent=5 // pred_check_branch
        %394 = sbr.rel (%p391) target = $region72
      $region71: #{tpu_custom_call.1} parent=5 // pred_region
        %s395 = ssub.s32 %s22, 1
        %p396 = scmp.lt.s32.totalorder %s27, 1
        %s397 = scalar_select %p396, %s27, 1
        %s398 = smul.addr %s397, 4
        %s399 = smul.addr %s398, 8
        %s400 = scalar_lea.vmem %s0, %s399
        %p401 = pneg %p48
        %p402 = pneg %p45
        %p403 = pneg %p69
        %p404 = pneg %p66
        %p405 = pneg %p90
        %p406 = pneg %p87
        %p407 = pneg %p111
        %p408 = pneg %p108
        %p409 = pneg %p132
        %p410 = pneg %p129
        %p411 = pneg %p153
        %p412 = pneg %p150
        %p413 = pneg %p174
        %p414 = pneg %p171
        %p415 = pneg %p195
        %p416 = pneg %p192
        %p417 = pneg %p216
        %p418 = pneg %p213
        %p419 = pneg %p237
        %p420 = pneg %p234
        %p421 = pneg %p258
        %p422 = pneg %p255
        %p423 = pneg %p279
        %p424 = pneg %p276
        %p425 = pneg %p300
        %p426 = pneg %p297
        %p427 = pneg %p326
        %p428 = pneg %p323
        %s429 = sand.u32 %s313, 1
        %s430 = scalar_lea.sflag [#allocation3], %s429
        %s431 = sand.u32 %s313, 1
        %s432 = smul.addr %s431, 32
        %s433 = scalar_lea.vmem [#allocation2], %s432
        %p434 = scmp.lt.s32.totalorder %s27, 1
        %s435 = scalar_select %p434, %s27, 1
        %s436 = smul.addr %s435, 4
        %s437 = smul.addr %s436, 8
        %s438 = scalar_lea.vmem %s0, %s437
        %v439 = vlaneseq
        %v440 = vshrl.u32 %v439, 7
        %v441 = vadd.s32 %v440, 8
        %v442 = vadd.s32 %v440, 16
        %v443 = vadd.s32 %v440, 24
        %v444 = vadd.s32 %v440, 32
        %v445 = vadd.s32 %v440, 40
        %v446 = vadd.s32 %v440, 48
        %v447 = vadd.s32 %v440, 56
        %v448 = vadd.s32 %v440, 64
        %v449 = vadd.s32 %v440, 72
        %v450 = vadd.s32 %v440, 80
        %v451 = vadd.s32 %v440, 88
        %v452 = vadd.s32 %v440, 96
        %v453 = vadd.s32 %v440, 104
        %v454 = vadd.s32 %v440, 112
        %v455 = vadd.s32 %v440, 120
        %v456 = vlaneseq
        %v457 = vand.u32 %v456, 127
        %v458 = vadd.s32 %v440, 1
        %v459 = vadd.s32 %v441, 1
        %v460 = vadd.s32 %v442, 1
        %v461 = vadd.s32 %v443, 1
        %v462 = vadd.s32 %v444, 1
        %v463 = vadd.s32 %v445, 1
        %v464 = vadd.s32 %v446, 1
        %v465 = vadd.s32 %v447, 1
        %v466 = vadd.s32 %v448, 1
        %v467 = vadd.s32 %v449, 1
        %v468 = vadd.s32 %v450, 1
        %v469 = vadd.s32 %v451, 1
        %v470 = vadd.s32 %v452, 1
        %v471 = vadd.s32 %v453, 1
        %v472 = vadd.s32 %v454, 1
        %v473 = vadd.s32 %v455, 1
        %vm474 = vcmp.eq.s32.totalorder %v457, %v458
        %vm475 = vcmp.eq.s32.totalorder %v457, %v459
        %vm476 = vcmp.eq.s32.totalorder %v457, %v460
        %vm477 = vcmp.eq.s32.totalorder %v457, %v461
        %vm478 = vcmp.eq.s32.totalorder %v457, %v462
        %vm479 = vcmp.eq.s32.totalorder %v457, %v463
        %vm480 = vcmp.eq.s32.totalorder %v457, %v464
        %vm481 = vcmp.eq.s32.totalorder %v457, %v465
        %vm482 = vcmp.eq.s32.totalorder %v457, %v466
        %vm483 = vcmp.eq.s32.totalorder %v457, %v467
        %vm484 = vcmp.eq.s32.totalorder %v457, %v468
        %vm485 = vcmp.eq.s32.totalorder %v457, %v469
        %vm486 = vcmp.eq.s32.totalorder %v457, %v470
        %vm487 = vcmp.eq.s32.totalorder %v457, %v471
        %vm488 = vcmp.eq.s32.totalorder %v457, %v472
        %vm489 = vcmp.eq.s32.totalorder %v457, %v473
        %v490 = vsel %vm474, 1, 0
        %v491 = vsel %vm475, 1, 0
        %v492 = vsel %vm476, 1, 0
        %v493 = vsel %vm477, 1, 0
        %v494 = vsel %vm478, 1, 0
        %v495 = vsel %vm479, 1, 0
        %v496 = vsel %vm480, 1, 0
        %v497 = vsel %vm481, 1, 0
        %v498 = vsel %vm482, 1, 0
        %v499 = vsel %vm483, 1, 0
        %v500 = vsel %vm484, 1, 0
        %v501 = vsel %vm485, 1, 0
        %v502 = vsel %vm486, 1, 0
        %v503 = vsel %vm487, 1, 0
        %v504 = vsel %vm488, 1, 0
        %v505 = vsel %vm489, 1, 0
        %v506 = vcvt.s32.f32 %v490
        %v507 = vcvt.s32.f32 %v491
        %v508 = vcvt.s32.f32 %v492
        %v509 = vcvt.s32.f32 %v493
        %v510 = vcvt.s32.f32 %v494
        %v511 = vcvt.s32.f32 %v495
        %v512 = vcvt.s32.f32 %v496
        %v513 = vcvt.s32.f32 %v497
        %v514 = vcvt.s32.f32 %v498
        %v515 = vcvt.s32.f32 %v499
        %v516 = vcvt.s32.f32 %v500
        %v517 = vcvt.s32.f32 %v501
        %v518 = vcvt.s32.f32 %v502
        %v519 = vcvt.s32.f32 %v503
        %v520 = vcvt.s32.f32 %v504
        %v521 = vcvt.s32.f32 %v505
        %v522 = vsub.s32 %v440, 1
        %v523 = vsub.s32 %v441, 1
        %v524 = vsub.s32 %v442, 1
        %v525 = vsub.s32 %v443, 1
        %v526 = vsub.s32 %v444, 1
        %v527 = vsub.s32 %v445, 1
        %v528 = vsub.s32 %v446, 1
        %v529 = vsub.s32 %v447, 1
        %v530 = vsub.s32 %v448, 1
        %v531 = vsub.s32 %v449, 1
        %v532 = vsub.s32 %v450, 1
        %v533 = vsub.s32 %v451, 1
        %v534 = vsub.s32 %v452, 1
        %v535 = vsub.s32 %v453, 1
        %v536 = vsub.s32 %v454, 1
        %v537 = vsub.s32 %v455, 1
        %vm538 = vcmp.eq.s32.totalorder %v457, %v522
        %vm539 = vcmp.eq.s32.totalorder %v457, %v523
        %vm540 = vcmp.eq.s32.totalorder %v457, %v524
        %vm541 = vcmp.eq.s32.totalorder %v457, %v525
        %vm542 = vcmp.eq.s32.totalorder %v457, %v526
        %vm543 = vcmp.eq.s32.totalorder %v457, %v527
        %vm544 = vcmp.eq.s32.totalorder %v457, %v528
        %vm545 = vcmp.eq.s32.totalorder %v457, %v529
        %vm546 = vcmp.eq.s32.totalorder %v457, %v530
        %vm547 = vcmp.eq.s32.totalorder %v457, %v531
        %vm548 = vcmp.eq.s32.totalorder %v457, %v532
        %vm549 = vcmp.eq.s32.totalorder %v457, %v533
        %vm550 = vcmp.eq.s32.totalorder %v457, %v534
        %vm551 = vcmp.eq.s32.totalorder %v457, %v535
        %vm552 = vcmp.eq.s32.totalorder %v457, %v536
        %vm553 = vcmp.eq.s32.totalorder %v457, %v537
        %v554 = vsel %vm538, 1, 0
        %v555 = vsel %vm539, 1, 0
        %v556 = vsel %vm540, 1, 0
        %v557 = vsel %vm541, 1, 0
        %v558 = vsel %vm542, 1, 0
        %v559 = vsel %vm543, 1, 0
        %v560 = vsel %vm544, 1, 0
        %v561 = vsel %vm545, 1, 0
        %v562 = vsel %vm546, 1, 0
        %v563 = vsel %vm547, 1, 0
        %v564 = vsel %vm548, 1, 0
        %v565 = vsel %vm549, 1, 0
        %v566 = vsel %vm550, 1, 0
        %v567 = vsel %vm551, 1, 0
        %v568 = vsel %vm552, 1, 0
        %v569 = vsel %vm553, 1, 0
        %v570 = vcvt.s32.f32 %v554
        %v571 = vcvt.s32.f32 %v555
        %v572 = vcvt.s32.f32 %v556
        %v573 = vcvt.s32.f32 %v557
        %v574 = vcvt.s32.f32 %v558
        %v575 = vcvt.s32.f32 %v559
        %v576 = vcvt.s32.f32 %v560
        %v577 = vcvt.s32.f32 %v561
        %v578 = vcvt.s32.f32 %v562
        %v579 = vcvt.s32.f32 %v563
        %v580 = vcvt.s32.f32 %v564
        %v581 = vcvt.s32.f32 %v565
        %v582 = vcvt.s32.f32 %v566
        %v583 = vcvt.s32.f32 %v567
        %v584 = vcvt.s32.f32 %v568
        %v585 = vcvt.s32.f32 %v569
        %v586 = vld [vmem:[%s438] sm:$0xff]
        %v587 = vld [vmem:[%s438 + $0x8] sm:$0xff]
        %v588 = vld [vmem:[%s438 + $0x10] sm:$0xff]
        %v589 = vld [vmem:[%s438 + $0x18] sm:$0xff]
        %590 = vmatprep.subr.mxu0 0.0
        %591 = vmatpush1.msra.mxu0 %v506
        %592 = vmatprep.subr.mxu0 0.0
        %593 = vmatpush1.msra.mxu0 %v507
        %594 = vmatprep.subr.mxu0 0.0
        %595 = vmatpush1.msra.mxu0 %v508
        %596 = vmatprep.subr.mxu0 0.0
        %597 = vmatpush1.msra.mxu0 %v509
        %598 = vmatprep.subr.mxu0 0.0
        %599 = vmatpush1.msra.mxu0 %v510
        %600 = vmatprep.subr.mxu0 0.0
        %601 = vmatpush1.msra.mxu0 %v511
        %602 = vmatprep.subr.mxu0 0.0
        %603 = vmatpush1.msra.mxu0 %v512
        %604 = vmatprep.subr.mxu0 0.0
        %605 = vmatpush1.msra.mxu0 %v513
        %606 = vmatprep.subr.mxu0 0.0
        %607 = vmatpush1.msra.mxu0 %v514
        %608 = vmatprep.subr.mxu0 0.0
        %609 = vmatpush1.msra.mxu0 %v515
        %610 = vmatprep.subr.mxu0 0.0
        %611 = vmatpush1.msra.mxu0 %v516
        %612 = vmatprep.subr.mxu0 0.0
        %613 = vmatpush1.msra.mxu0 %v517
        %614 = vmatprep.subr.mxu0 0.0
        %615 = vmatpush1.msra.mxu0 %v518
        %616 = vmatprep.subr.mxu0 0.0
        %617 = vmatpush1.msra.mxu0 %v519
        %618 = vmatprep.subr.mxu0 0.0
        %619 = vmatpush1.msra.mxu0 %v520
        %620 = vmatprep.subr.mxu0 0.0
        %621 = vmatpush1.msra.mxu0 %v521
        %622 = vmatprep.subr.mxu0 0.0
        %623 = vmatpush1.msra.mxu0 0.0
        %624 = vmatprep.subr.mxu0 0.0
        %625 = vmatpush1.msra.mxu0 0.0
        %626 = vmatprep.subr.mxu0 0.0
        %627 = vmatpush1.msra.mxu0 0.0
        %628 = vmatprep.subr.mxu0 0.0
        %629 = vmatpush1.msra.mxu0 0.0
        %630 = vmatprep.subr.mxu0 0.0
        %631 = vmatpush1.msra.mxu0 0.0
        %632 = vmatprep.subr.mxu0 0.0
        %633 = vmatpush1.msra.mxu0 0.0
        %634 = vmatprep.subr.mxu0 0.0
        %635 = vmatpush1.msra.mxu0 0.0
        %636 = vmatprep.subr.mxu0 0.0
        %637 = vmatpush1.msra.mxu0 0.0
        %638 = vmatprep.subr.mxu0 0.0
        %639 = vmatpush1.msra.mxu0 0.0
        %640 = vmatprep.subr.mxu0 0.0
        %641 = vmatpush1.msra.mxu0 0.0
        %642 = vmatprep.subr.mxu0 0.0
        %643 = vmatpush1.msra.mxu0 0.0
        %644 = vmatprep.subr.mxu0 0.0
        %645 = vmatpush1.msra.mxu0 0.0
        %646 = vmatprep.subr.mxu0 0.0
        %647 = vmatpush1.msra.mxu0 0.0
        %648 = vmatprep.subr.mxu0 0.0
        %649 = vmatpush1.msra.mxu0 0.0
        %650 = vmatprep.subr.mxu0 0.0
        %651 = vmatpush1.msra.mxu0 0.0
        %652 = vmatprep.subr.mxu0 0.0
        %653 = vmatpush1.msra.mxu0 0.0
        %654 = vmatprep.mubr.f32.mxu0 0.0
        %655 = vmatmul.mubr.f32.gmra.mrb[0].mxu0 %v586
        %v656 = vpop.f32.mrb[0].mxu0
        %v657 = vadd.f32 0.0, %v656
        %v658 = vpop.f32.mrb[0].mxu0
        %659 = vmatprep.mubr.f32.mxu0 0.0
        %660 = vmatmul.mubr.f32.gmra.mrb[0].mxu0 %v587
        %v661 = vpop.f32.mrb[0].mxu0
        %v662 = vadd.f32 0.0, %v661
        %v663 = vpop.f32.mrb[0].mxu0
        %664 = vmatprep.mubr.f32.mxu0 0.0
        %665 = vmatmul.mubr.f32.gmra.mrb[0].mxu0 %v588
        %v666 = vpop.f32.mrb[0].mxu0
        %v667 = vadd.f32 0.0, %v666
        %v668 = vpop.f32.mrb[0].mxu0
        %669 = vmatprep.mubr.f32.mxu0 0.0
        %670 = vmatmul.mubr.f32.gmra.mrb[0].mxu0 %v589
        %v671 = vpop.f32.mrb[0].mxu0
        %v672 = vadd.f32 0.0, %v671
        %v673 = vpop.f32.mrb[0].mxu0
        %674 = vdwg.mxu0
        %675 = vmatprep.subr.mxu0 0.0
        %676 = vmatpush1.msra.mxu0 %v570
        %677 = vmatprep.subr.mxu0 0.0
        %678 = vmatpush1.msra.mxu0 %v571
        %679 = vmatprep.subr.mxu0 0.0
        %680 = vmatpush1.msra.mxu0 %v572
        %681 = vmatprep.subr.mxu0 0.0
        %682 = vmatpush1.msra.mxu0 %v573
        %683 = vmatprep.subr.mxu0 0.0
        %684 = vmatpush1.msra.mxu0 %v574
        %685 = vmatprep.subr.mxu0 0.0
        %686 = vmatpush1.msra.mxu0 %v575
        %687 = vmatprep.subr.mxu0 0.0
        %688 = vmatpush1.msra.mxu0 %v576
        %689 = vmatprep.subr.mxu0 0.0
        %690 = vmatpush1.msra.mxu0 %v577
        %691 = vmatprep.subr.mxu0 0.0
        %692 = vmatpush1.msra.mxu0 %v578
        %693 = vmatprep.subr.mxu0 0.0
        %694 = vmatpush1.msra.mxu0 %v579
        %695 = vmatprep.subr.mxu0 0.0
        %696 = vmatpush1.msra.mxu0 %v580
        %697 = vmatprep.subr.mxu0 0.0
        %698 = vmatpush1.msra.mxu0 %v581
        %699 = vmatprep.subr.mxu0 0.0
        %700 = vmatpush1.msra.mxu0 %v582
        %701 = vmatprep.subr.mxu0 0.0
        %702 = vmatpush1.msra.mxu0 %v583
        %703 = vmatprep.subr.mxu0 0.0
        %704 = vmatpush1.msra.mxu0 %v584
        %705 = vmatprep.subr.mxu0 0.0
        %706 = vmatpush1.msra.mxu0 %v585
        %707 = vmatprep.subr.mxu0 0.0
        %708 = vmatpush1.msra.mxu0 0.0
        %709 = vmatprep.subr.mxu0 0.0
        %710 = vmatpush1.msra.mxu0 0.0
        %711 = vmatprep.subr.mxu0 0.0
        %712 = vmatpush1.msra.mxu0 0.0
        %713 = vmatprep.subr.mxu0 0.0
        %714 = vmatpush1.msra.mxu0 0.0
        %715 = vmatprep.subr.mxu0 0.0
        %716 = vmatpush1.msra.mxu0 0.0
        %717 = vmatprep.subr.mxu0 0.0
        %718 = vmatpush1.msra.mxu0 0.0
        %719 = vmatprep.subr.mxu0 0.0
        %720 = vmatpush1.msra.mxu0 0.0
        %721 = vmatprep.subr.mxu0 0.0
        %722 = vmatpush1.msra.mxu0 0.0
        %723 = vmatprep.subr.mxu0 0.0
        %724 = vmatpush1.msra.mxu0 0.0
        %725 = vmatprep.subr.mxu0 0.0
        %726 = vmatpush1.msra.mxu0 0.0
        %727 = vmatprep.subr.mxu0 0.0
        %728 = vmatpush1.msra.mxu0 0.0
        %729 = vmatprep.subr.mxu0 0.0
        %730 = vmatpush1.msra.mxu0 0.0
        %731 = vmatprep.subr.mxu0 0.0
        %732 = vmatpush1.msra.mxu0 0.0
        %733 = vmatprep.subr.mxu0 0.0
        %734 = vmatpush1.msra.mxu0 0.0
        %735 = vmatprep.subr.mxu0 0.0
        %736 = vmatpush1.msra.mxu0 0.0
        %737 = vmatprep.subr.mxu0 0.0
        %738 = vmatpush1.msra.mxu0 0.0
        %739 = vmatprep.mubr.f32.mxu0 0.0
        %740 = vmatmul.mubr.f32.gmra.mrb[0].mxu0 %v586
        %v741 = vpop.f32.mrb[0].mxu0
        %v742 = vadd.f32 0.0, %v741
        %v743 = vpop.f32.mrb[0].mxu0
        %744 = vmatprep.mubr.f32.mxu0 0.0
        %745 = vmatmul.mubr.f32.gmra.mrb[0].mxu0 %v587
        %v746 = vpop.f32.mrb[0].mxu0
        %v747 = vadd.f32 0.0, %v746
        %v748 = vpop.f32.mrb[0].mxu0
        %749 = vmatprep.mubr.f32.mxu0 0.0
        %750 = vmatmul.mubr.f32.gmra.mrb[0].mxu0 %v588
        %v751 = vpop.f32.mrb[0].mxu0
        %v752 = vadd.f32 0.0, %v751
        %v753 = vpop.f32.mrb[0].mxu0
        %754 = vmatprep.mubr.f32.mxu0 0.0
        %755 = vmatmul.mubr.f32.gmra.mrb[0].mxu0 %v589
        %v756 = vpop.f32.mrb[0].mxu0
        %v757 = vadd.f32 0.0, %v756
        %v758 = vpop.f32.mrb[0].mxu0
        %759 = vdwg.mxu0
        %v760 = vld [vmem:[%s1] sm:$0xff]
        %v761 = vld [vmem:[%s1 + $0x8] sm:$0xff]
        %v762 = vld [vmem:[%s2] sm:$0xff]
        %v763 = vld [vmem:[%s2 + $0x8] sm:$0xff]
        %vm764 = vcmask 261120
        %v766 = vsel %vm764, %v762, 0
        %v769 = vsel %vm764, %v763, 0
        %771 = vmatprep.subr.mxu0 0.0
        %772 = vmatpush1.msra.mxu0 %v586
        %773 = vmatprep.subr.mxu0 0.0
        %774 = vmatpush1.msra.mxu0 %v587
        %775 = vmatprep.subr.mxu0 0.0
        %776 = vmatpush1.msra.mxu0 %v588
        %777 = vmatprep.subr.mxu0 0.0
        %778 = vmatpush1.msra.mxu0 %v589
        %779 = vmatprep.subr.mxu0 0.0
        %780 = vmatpush1.msra.mxu0 0.0
        %781 = vmatprep.subr.mxu0 0.0
        %782 = vmatpush1.msra.mxu0 0.0
        %783 = vmatprep.subr.mxu0 0.0
        %784 = vmatpush1.msra.mxu0 0.0
        %785 = vmatprep.subr.mxu0 0.0
        %786 = vmatpush1.msra.mxu0 0.0
        %787 = vmatprep.subr.mxu0 0.0
        %788 = vmatpush1.msra.mxu0 0.0
        %789 = vmatprep.subr.mxu0 0.0
        %790 = vmatpush1.msra.mxu0 0.0
        %791 = vmatprep.subr.mxu0 0.0
        %792 = vmatpush1.msra.mxu0 0.0
        %793 = vmatprep.subr.mxu0 0.0
        %794 = vmatpush1.msra.mxu0 0.0
        %795 = vmatprep.subr.mxu0 0.0
        %796 = vmatpush1.msra.mxu0 0.0
        %797 = vmatprep.subr.mxu0 0.0
        %798 = vmatpush1.msra.mxu0 0.0
        %799 = vmatprep.subr.mxu0 0.0
        %800 = vmatpush1.msra.mxu0 0.0
        %801 = vmatprep.subr.mxu0 0.0
        %802 = vmatpush1.msra.mxu0 0.0
        %803 = vmatprep.subr.mxu0 0.0
        %804 = vmatpush1.msra.mxu0 0.0
        %805 = vmatprep.subr.mxu0 0.0
        %806 = vmatpush1.msra.mxu0 0.0
        %807 = vmatprep.subr.mxu0 0.0
        %808 = vmatpush1.msra.mxu0 0.0
        %809 = vmatprep.subr.mxu0 0.0
        %810 = vmatpush1.msra.mxu0 0.0
        %811 = vmatprep.subr.mxu0 0.0
        %812 = vmatpush1.msra.mxu0 0.0
        %813 = vmatprep.subr.mxu0 0.0
        %814 = vmatpush1.msra.mxu0 0.0
        %815 = vmatprep.subr.mxu0 0.0
        %816 = vmatpush1.msra.mxu0 0.0
        %817 = vmatprep.subr.mxu0 0.0
        %818 = vmatpush1.msra.mxu0 0.0
        %819 = vmatprep.subr.mxu0 0.0
        %820 = vmatpush1.msra.mxu0 0.0
        %821 = vmatprep.subr.mxu0 0.0
        %822 = vmatpush1.msra.mxu0 0.0
        %823 = vmatprep.subr.mxu0 0.0
        %824 = vmatpush1.msra.mxu0 0.0
        %825 = vmatprep.subr.mxu0 0.0
        %826 = vmatpush1.msra.mxu0 0.0
        %827 = vmatprep.subr.mxu0 0.0
        %828 = vmatpush1.msra.mxu0 0.0
        %829 = vmatprep.subr.mxu0 0.0
        %830 = vmatpush1.msra.mxu0 0.0
        %831 = vmatprep.subr.mxu0 0.0
        %832 = vmatpush1.msra.mxu0 0.0
        %833 = vmatprep.subr.mxu0 0.0
        %834 = vmatpush1.msra.mxu0 0.0
        %835 = vmatprep.mubr.f32.mxu0 0.0
        %836 = vmatmul.mubr.f32.gmra.mrb[0].mxu0 %v766
        %v837 = vpop.f32.mrb[0].mxu0
        %v838 = vadd.f32 0.0, %v837
        %v839 = vpop.f32.mrb[0].mxu0
        %840 = vmatprep.mubr.f32.mxu0 0.0
        %841 = vmatmul.mubr.f32.gmra.mrb[0].mxu0 %v769
        %v842 = vpop.f32.mrb[0].mxu0
        %v843 = vadd.f32 0.0, %v842
        %v844 = vpop.f32.mrb[0].mxu0
        %845 = vdwg.mxu0
        %v847 = vsel %vm764, %v760, 0
        %v850 = vsel %vm764, %v761, 0
        %852 = vmatprep.subr.mxu0 0.0
        %853 = vmatpush1.msra.mxu0 %v657
        %854 = vmatprep.subr.mxu0 0.0
        %855 = vmatpush1.msra.mxu0 %v662
        %856 = vmatprep.subr.mxu0 0.0
        %857 = vmatpush1.msra.mxu0 %v667
        %858 = vmatprep.subr.mxu0 0.0
        %859 = vmatpush1.msra.mxu0 %v672
        %860 = vmatprep.subr.mxu0 0.0
        %861 = vmatpush1.msra.mxu0 0.0
        %862 = vmatprep.subr.mxu0 0.0
        %863 = vmatpush1.msra.mxu0 0.0
        %864 = vmatprep.subr.mxu0 0.0
        %865 = vmatpush1.msra.mxu0 0.0
        %866 = vmatprep.subr.mxu0 0.0
        %867 = vmatpush1.msra.mxu0 0.0
        %868 = vmatprep.subr.mxu0 0.0
        %869 = vmatpush1.msra.mxu0 0.0
        %870 = vmatprep.subr.mxu0 0.0
        %871 = vmatpush1.msra.mxu0 0.0
        %872 = vmatprep.subr.mxu0 0.0
        %873 = vmatpush1.msra.mxu0 0.0
        %874 = vmatprep.subr.mxu0 0.0
        %875 = vmatpush1.msra.mxu0 0.0
        %876 = vmatprep.subr.mxu0 0.0
        %877 = vmatpush1.msra.mxu0 0.0
        %878 = vmatprep.subr.mxu0 0.0
        %879 = vmatpush1.msra.mxu0 0.0
        %880 = vmatprep.subr.mxu0 0.0
        %881 = vmatpush1.msra.mxu0 0.0
        %882 = vmatprep.subr.mxu0 0.0
        %883 = vmatpush1.msra.mxu0 0.0
        %884 = vmatprep.subr.mxu0 0.0
        %885 = vmatpush1.msra.mxu0 0.0
        %886 = vmatprep.subr.mxu0 0.0
        %887 = vmatpush1.msra.mxu0 0.0
        %888 = vmatprep.subr.mxu0 0.0
        %889 = vmatpush1.msra.mxu0 0.0
        %890 = vmatprep.subr.mxu0 0.0
        %891 = vmatpush1.msra.mxu0 0.0
        %892 = vmatprep.subr.mxu0 0.0
        %893 = vmatpush1.msra.mxu0 0.0
        %894 = vmatprep.subr.mxu0 0.0
        %895 = vmatpush1.msra.mxu0 0.0
        %896 = vmatprep.subr.mxu0 0.0
        %897 = vmatpush1.msra.mxu0 0.0
        %898 = vmatprep.subr.mxu0 0.0
        %899 = vmatpush1.msra.mxu0 0.0
        %900 = vmatprep.subr.mxu0 0.0
        %901 = vmatpush1.msra.mxu0 0.0
        %902 = vmatprep.subr.mxu0 0.0
        %903 = vmatpush1.msra.mxu0 0.0
        %904 = vmatprep.subr.mxu0 0.0
        %905 = vmatpush1.msra.mxu0 0.0
        %906 = vmatprep.subr.mxu0 0.0
        %907 = vmatpush1.msra.mxu0 0.0
        %908 = vmatprep.subr.mxu0 0.0
        %909 = vmatpush1.msra.mxu0 0.0
        %910 = vmatprep.subr.mxu0 0.0
        %911 = vmatpush1.msra.mxu0 0.0
        %912 = vmatprep.subr.mxu0 0.0
        %913 = vmatpush1.msra.mxu0 0.0
        %914 = vmatprep.subr.mxu0 0.0
        %915 = vmatpush1.msra.mxu0 0.0
        %916 = vmatprep.mubr.f32.mxu0 0.0
        %917 = vmatmul.mubr.f32.gmra.mrb[0].mxu0 %v847
        %v918 = vpop.f32.mrb[0].mxu0
        %v919 = vadd.f32 %v838, %v918
        %v920 = vpop.f32.mrb[0].mxu0
        %921 = vmatprep.mubr.f32.mxu0 0.0
        %922 = vmatmul.mubr.f32.gmra.mrb[0].mxu0 %v850
        %v923 = vpop.f32.mrb[0].mxu0
        %v924 = vadd.f32 %v843, %v923
        %v925 = vpop.f32.mrb[0].mxu0
        %926 = vdwg.mxu0
        %v927 = vld [vmem:[%s3] sm:$0xff]
        %v928 = vld [vmem:[%s3 + $0x8] sm:$0xff]
        %v930 = vsel %vm764, %v927, 0
        %v933 = vsel %vm764, %v928, 0
        %935 = vmatprep.subr.mxu0 0.0
        %936 = vmatpush1.msra.mxu0 %v742
        %937 = vmatprep.subr.mxu0 0.0
        %938 = vmatpush1.msra.mxu0 %v747
        %939 = vmatprep.subr.mxu0 0.0
        %940 = vmatpush1.msra.mxu0 %v752
        %941 = vmatprep.subr.mxu0 0.0
        %942 = vmatpush1.msra.mxu0 %v757
        %943 = vmatprep.subr.mxu0 0.0
        %944 = vmatpush1.msra.mxu0 0.0
        %945 = vmatprep.subr.mxu0 0.0
        %946 = vmatpush1.msra.mxu0 0.0
        %947 = vmatprep.subr.mxu0 0.0
        %948 = vmatpush1.msra.mxu0 0.0
        %949 = vmatprep.subr.mxu0 0.0
        %950 = vmatpush1.msra.mxu0 0.0
        %951 = vmatprep.subr.mxu0 0.0
        %952 = vmatpush1.msra.mxu0 0.0
        %953 = vmatprep.subr.mxu0 0.0
        %954 = vmatpush1.msra.mxu0 0.0
        %955 = vmatprep.subr.mxu0 0.0
        %956 = vmatpush1.msra.mxu0 0.0
        %957 = vmatprep.subr.mxu0 0.0
        %958 = vmatpush1.msra.mxu0 0.0
        %959 = vmatprep.subr.mxu0 0.0
        %960 = vmatpush1.msra.mxu0 0.0
        %961 = vmatprep.subr.mxu0 0.0
        %962 = vmatpush1.msra.mxu0 0.0
        %963 = vmatprep.subr.mxu0 0.0
        %964 = vmatpush1.msra.mxu0 0.0
        %965 = vmatprep.subr.mxu0 0.0
        %966 = vmatpush1.msra.mxu0 0.0
        %967 = vmatprep.subr.mxu0 0.0
        %968 = vmatpush1.msra.mxu0 0.0
        %969 = vmatprep.subr.mxu0 0.0
        %970 = vmatpush1.msra.mxu0 0.0
        %971 = vmatprep.subr.mxu0 0.0
        %972 = vmatpush1.msra.mxu0 0.0
        %973 = vmatprep.subr.mxu0 0.0
        %974 = vmatpush1.msra.mxu0 0.0
        %975 = vmatprep.subr.mxu0 0.0
        %976 = vmatpush1.msra.mxu0 0.0
        %977 = vmatprep.subr.mxu0 0.0
        %978 = vmatpush1.msra.mxu0 0.0
        %979 = vmatprep.subr.mxu0 0.0
        %980 = vmatpush1.msra.mxu0 0.0
        %981 = vmatprep.subr.mxu0 0.0
        %982 = vmatpush1.msra.mxu0 0.0
        %983 = vmatprep.subr.mxu0 0.0
        %984 = vmatpush1.msra.mxu0 0.0
        %985 = vmatprep.subr.mxu0 0.0
        %986 = vmatpush1.msra.mxu0 0.0
        %987 = vmatprep.subr.mxu0 0.0
        %988 = vmatpush1.msra.mxu0 0.0
        %989 = vmatprep.subr.mxu0 0.0
        %990 = vmatpush1.msra.mxu0 0.0
        %991 = vmatprep.subr.mxu0 0.0
        %992 = vmatpush1.msra.mxu0 0.0
        %993 = vmatprep.subr.mxu0 0.0
        %994 = vmatpush1.msra.mxu0 0.0
        %995 = vmatprep.subr.mxu0 0.0
        %996 = vmatpush1.msra.mxu0 0.0
        %997 = vmatprep.subr.mxu0 0.0
        %998 = vmatpush1.msra.mxu0 0.0
        %999 = vmatprep.mubr.f32.mxu0 0.0
        %1000 = vmatmul.mubr.f32.gmra.mrb[0].mxu0 %v930
        %v1001 = vpop.f32.mrb[0].mxu0
        %v1002 = vadd.f32 0.0, %v1001
        %v1003 = vpop.f32.mrb[0].mxu0
        %1004 = vmatprep.mubr.f32.mxu0 0.0
        %1005 = vmatmul.mubr.f32.gmra.mrb[0].mxu0 %v933
        %v1006 = vpop.f32.mrb[0].mxu0
        %v1007 = vadd.f32 0.0, %v1006
        %v1008 = vpop.f32.mrb[0].mxu0
        %1009 = vdwg.mxu0
        %v1010 = vadd.f32 %v919, %v1002
        %v1011 = vadd.f32 %v924, %v1007
        %v1012 = vld [vmem:[%s4] sm:$0xff]
        %v1013 = vld [vmem:[%s4 + $0x8] sm:$0xff]
        %1015 = vset.pattern.permute.xlu0 0
        %1016 = vperm.xlu0 %1015, %v1012
        %v1017 = vpop.permute.xlu0 %1016
        %1020 = vset.pattern.permute.xlu0 0
        %1021 = vperm.xlu0 %1020, %v1013
        %v1022 = vpop.permute.xlu0 %1021
        %v1024 = vadd.f32 %v1010, %v1017
        %v1025 = vadd.f32 %v1011, %v1022
        %v1026 = vmax.f32 %v1024, 0.0
        %v1027 = vmax.f32 %v1025, 0.0
        %1028 = vmatprep.subr.mxu0 0.0
        %1029 = vmatpush1.msra.mxu0 %v506
        %1030 = vmatprep.subr.mxu0 0.0
        %1031 = vmatpush1.msra.mxu0 %v507
        %1032 = vmatprep.subr.mxu0 0.0
        %1033 = vmatpush1.msra.mxu0 %v508
        %1034 = vmatprep.subr.mxu0 0.0
        %1035 = vmatpush1.msra.mxu0 %v509
        %1036 = vmatprep.subr.mxu0 0.0
        %1037 = vmatpush1.msra.mxu0 %v510
        %1038 = vmatprep.subr.mxu0 0.0
        %1039 = vmatpush1.msra.mxu0 %v511
        %1040 = vmatprep.subr.mxu0 0.0
        %1041 = vmatpush1.msra.mxu0 %v512
        %1042 = vmatprep.subr.mxu0 0.0
        %1043 = vmatpush1.msra.mxu0 %v513
        %1044 = vmatprep.subr.mxu0 0.0
        %1045 = vmatpush1.msra.mxu0 %v514
        %1046 = vmatprep.subr.mxu0 0.0
        %1047 = vmatpush1.msra.mxu0 %v515
        %1048 = vmatprep.subr.mxu0 0.0
        %1049 = vmatpush1.msra.mxu0 %v516
        %1050 = vmatprep.subr.mxu0 0.0
        %1051 = vmatpush1.msra.mxu0 %v517
        %1052 = vmatprep.subr.mxu0 0.0
        %1053 = vmatpush1.msra.mxu0 %v518
        %1054 = vmatprep.subr.mxu0 0.0
        %1055 = vmatpush1.msra.mxu0 %v519
        %1056 = vmatprep.subr.mxu0 0.0
        %1057 = vmatpush1.msra.mxu0 %v520
        %1058 = vmatprep.subr.mxu0 0.0
        %1059 = vmatpush1.msra.mxu0 %v521
        %1060 = vmatprep.subr.mxu0 0.0
        %1061 = vmatpush1.msra.mxu0 0.0
        %1062 = vmatprep.subr.mxu0 0.0
        %1063 = vmatpush1.msra.mxu0 0.0
        %1064 = vmatprep.subr.mxu0 0.0
        %1065 = vmatpush1.msra.mxu0 0.0
        %1066 = vmatprep.subr.mxu0 0.0
        %1067 = vmatpush1.msra.mxu0 0.0
        %1068 = vmatprep.subr.mxu0 0.0
        %1069 = vmatpush1.msra.mxu0 0.0
        %1070 = vmatprep.subr.mxu0 0.0
        %1071 = vmatpush1.msra.mxu0 0.0
        %1072 = vmatprep.subr.mxu0 0.0
        %1073 = vmatpush1.msra.mxu0 0.0
        %1074 = vmatprep.subr.mxu0 0.0
        %1075 = vmatpush1.msra.mxu0 0.0
        %1076 = vmatprep.subr.mxu0 0.0
        %1077 = vmatpush1.msra.mxu0 0.0
        %1078 = vmatprep.subr.mxu0 0.0
        %1079 = vmatpush1.msra.mxu0 0.0
        %1080 = vmatprep.subr.mxu0 0.0
        %1081 = vmatpush1.msra.mxu0 0.0
        %1082 = vmatprep.subr.mxu0 0.0
        %1083 = vmatpush1.msra.mxu0 0.0
        %1084 = vmatprep.subr.mxu0 0.0
        %1085 = vmatpush1.msra.mxu0 0.0
        %1086 = vmatprep.subr.mxu0 0.0
        %1087 = vmatpush1.msra.mxu0 0.0
        %1088 = vmatprep.subr.mxu0 0.0
        %1089 = vmatpush1.msra.mxu0 0.0
        %1090 = vmatprep.subr.mxu0 0.0
        %1091 = vmatpush1.msra.mxu0 0.0
        %1092 = vmatprep.mubr.f32.mxu0 0.0
        %1093 = vmatmul.mubr.f32.gmra.mrb[0].mxu0 %v1026
        %v1094 = vpop.f32.mrb[0].mxu0
        %v1095 = vadd.f32 0.0, %v1094
        %v1096 = vpop.f32.mrb[0].mxu0
        %1097 = vmatprep.mubr.f32.mxu0 0.0
        %1098 = vmatmul.mubr.f32.gmra.mrb[0].mxu0 %v1027
        %v1099 = vpop.f32.mrb[0].mxu0
        %v1100 = vadd.f32 0.0, %v1099
        %v1101 = vpop.f32.mrb[0].mxu0
        %1102 = vdwg.mxu0
        %1103 = vmatprep.subr.mxu0 0.0
        %1104 = vmatpush1.msra.mxu0 %v570
        %1105 = vmatprep.subr.mxu0 0.0
        %1106 = vmatpush1.msra.mxu0 %v571
        %1107 = vmatprep.subr.mxu0 0.0
        %1108 = vmatpush1.msra.mxu0 %v572
        %1109 = vmatprep.subr.mxu0 0.0
        %1110 = vmatpush1.msra.mxu0 %v573
        %1111 = vmatprep.subr.mxu0 0.0
        %1112 = vmatpush1.msra.mxu0 %v574
        %1113 = vmatprep.subr.mxu0 0.0
        %1114 = vmatpush1.msra.mxu0 %v575
        %1115 = vmatprep.subr.mxu0 0.0
        %1116 = vmatpush1.msra.mxu0 %v576
        %1117 = vmatprep.subr.mxu0 0.0
        %1118 = vmatpush1.msra.mxu0 %v577
        %1119 = vmatprep.subr.mxu0 0.0
        %1120 = vmatpush1.msra.mxu0 %v578
        %1121 = vmatprep.subr.mxu0 0.0
        %1122 = vmatpush1.msra.mxu0 %v579
        %1123 = vmatprep.subr.mxu0 0.0
        %1124 = vmatpush1.msra.mxu0 %v580
        %1125 = vmatprep.subr.mxu0 0.0
        %1126 = vmatpush1.msra.mxu0 %v581
        %1127 = vmatprep.subr.mxu0 0.0
        %1128 = vmatpush1.msra.mxu0 %v582
        %1129 = vmatprep.subr.mxu0 0.0
        %1130 = vmatpush1.msra.mxu0 %v583
        %1131 = vmatprep.subr.mxu0 0.0
        %1132 = vmatpush1.msra.mxu0 %v584
        %1133 = vmatprep.subr.mxu0 0.0
        %1134 = vmatpush1.msra.mxu0 %v585
        %1135 = vmatprep.subr.mxu0 0.0
        %1136 = vmatpush1.msra.mxu0 0.0
        %1137 = vmatprep.subr.mxu0 0.0
        %1138 = vmatpush1.msra.mxu0 0.0
        %1139 = vmatprep.subr.mxu0 0.0
        %1140 = vmatpush1.msra.mxu0 0.0
        %1141 = vmatprep.subr.mxu0 0.0
        %1142 = vmatpush1.msra.mxu0 0.0
        %1143 = vmatprep.subr.mxu0 0.0
        %1144 = vmatpush1.msra.mxu0 0.0
        %1145 = vmatprep.subr.mxu0 0.0
        %1146 = vmatpush1.msra.mxu0 0.0
        %1147 = vmatprep.subr.mxu0 0.0
        %1148 = vmatpush1.msra.mxu0 0.0
        %1149 = vmatprep.subr.mxu0 0.0
        %1150 = vmatpush1.msra.mxu0 0.0
        %1151 = vmatprep.subr.mxu0 0.0
        %1152 = vmatpush1.msra.mxu0 0.0
        %1153 = vmatprep.subr.mxu0 0.0
        %1154 = vmatpush1.msra.mxu0 0.0
        %1155 = vmatprep.subr.mxu0 0.0
        %1156 = vmatpush1.msra.mxu0 0.0
        %1157 = vmatprep.subr.mxu0 0.0
        %1158 = vmatpush1.msra.mxu0 0.0
        %1159 = vmatprep.subr.mxu0 0.0
        %1160 = vmatpush1.msra.mxu0 0.0
        %1161 = vmatprep.subr.mxu0 0.0
        %1162 = vmatpush1.msra.mxu0 0.0
        %1163 = vmatprep.subr.mxu0 0.0
        %1164 = vmatpush1.msra.mxu0 0.0
        %1165 = vmatprep.subr.mxu0 0.0
        %1166 = vmatpush1.msra.mxu0 0.0
        %1167 = vmatprep.mubr.f32.mxu0 0.0
        %1168 = vmatmul.mubr.f32.gmra.mrb[0].mxu0 %v1026
        %v1169 = vpop.f32.mrb[0].mxu0
        %v1170 = vadd.f32 0.0, %v1169
        %v1171 = vpop.f32.mrb[0].mxu0
        %1172 = vmatprep.mubr.f32.mxu0 0.0
        %1173 = vmatmul.mubr.f32.gmra.mrb[0].mxu0 %v1027
        %v1174 = vpop.f32.mrb[0].mxu0
        %v1175 = vadd.f32 0.0, %v1174
        %v1176 = vpop.f32.mrb[0].mxu0
        %1177 = vdwg.mxu0
        %v1178 = vld [vmem:[%s5] sm:$0xff]
        %v1179 = vld [vmem:[%s5 + $0x8] sm:$0xff]
        %v1180 = vld [vmem:[%s6] sm:$0xff]
        %v1181 = vld [vmem:[%s6 + $0x8] sm:$0xff]
        %vm1182 = vcmask 130048
        %v1184 = vsel %vm1182, %v1180, 0
        %v1187 = vsel %vm1182, %v1181, 0
        %1189 = vmatprep.subr.mxu0 0.0
        %1190 = vmatpush1.msra.mxu0 %v1026
        %1191 = vmatprep.subr.mxu0 0.0
        %1192 = vmatpush1.msra.mxu0 %v1027
        %1193 = vmatprep.subr.mxu0 0.0
        %1194 = vmatpush1.msra.mxu0 0.0
        %1195 = vmatprep.subr.mxu0 0.0
        %1196 = vmatpush1.msra.mxu0 0.0
        %1197 = vmatprep.subr.mxu0 0.0
        %1198 = vmatpush1.msra.mxu0 0.0
        %1199 = vmatprep.subr.mxu0 0.0
        %1200 = vmatpush1.msra.mxu0 0.0
        %1201 = vmatprep.subr.mxu0 0.0
        %1202 = vmatpush1.msra.mxu0 0.0
        %1203 = vmatprep.subr.mxu0 0.0
        %1204 = vmatpush1.msra.mxu0 0.0
        %1205 = vmatprep.subr.mxu0 0.0
        %1206 = vmatpush1.msra.mxu0 0.0
        %1207 = vmatprep.subr.mxu0 0.0
        %1208 = vmatpush1.msra.mxu0 0.0
        %1209 = vmatprep.subr.mxu0 0.0
        %1210 = vmatpush1.msra.mxu0 0.0
        %1211 = vmatprep.subr.mxu0 0.0
        %1212 = vmatpush1.msra.mxu0 0.0
        %1213 = vmatprep.subr.mxu0 0.0
        %1214 = vmatpush1.msra.mxu0 0.0
        %1215 = vmatprep.subr.mxu0 0.0
        %1216 = vmatpush1.msra.mxu0 0.0
        %1217 = vmatprep.subr.mxu0 0.0
        %1218 = vmatpush1.msra.mxu0 0.0
        %1219 = vmatprep.subr.mxu0 0.0
        %1220 = vmatpush1.msra.mxu0 0.0
        %1221 = vmatprep.subr.mxu0 0.0
        %1222 = vmatpush1.msra.mxu0 0.0
        %1223 = vmatprep.subr.mxu0 0.0
        %1224 = vmatpush1.msra.mxu0 0.0
        %1225 = vmatprep.subr.mxu0 0.0
        %1226 = vmatpush1.msra.mxu0 0.0
        %1227 = vmatprep.subr.mxu0 0.0
        %1228 = vmatpush1.msra.mxu0 0.0
        %1229 = vmatprep.subr.mxu0 0.0
        %1230 = vmatpush1.msra.mxu0 0.0
        %1231 = vmatprep.subr.mxu0 0.0
        %1232 = vmatpush1.msra.mxu0 0.0
        %1233 = vmatprep.subr.mxu0 0.0
        %1234 = vmatpush1.msra.mxu0 0.0
        %1235 = vmatprep.subr.mxu0 0.0
        %1236 = vmatpush1.msra.mxu0 0.0
        %1237 = vmatprep.subr.mxu0 0.0
        %1238 = vmatpush1.msra.mxu0 0.0
        %1239 = vmatprep.subr.mxu0 0.0
        %1240 = vmatpush1.msra.mxu0 0.0
        %1241 = vmatprep.subr.mxu0 0.0
        %1242 = vmatpush1.msra.mxu0 0.0
        %1243 = vmatprep.subr.mxu0 0.0
        %1244 = vmatpush1.msra.mxu0 0.0
        %1245 = vmatprep.subr.mxu0 0.0
        %1246 = vmatpush1.msra.mxu0 0.0
        %1247 = vmatprep.subr.mxu0 0.0
        %1248 = vmatpush1.msra.mxu0 0.0
        %1249 = vmatprep.subr.mxu0 0.0
        %1250 = vmatpush1.msra.mxu0 0.0
        %1251 = vmatprep.subr.mxu0 0.0
        %1252 = vmatpush1.msra.mxu0 0.0
        %1253 = vmatprep.mubr.f32.mxu0 0.0
        %1254 = vmatmul.mubr.f32.gmra.mrb[0].mxu0 %v1184
        %v1255 = vpop.f32.mrb[0].mxu0
        %v1256 = vadd.f32 0.0, %v1255
        %v1257 = vpop.f32.mrb[0].mxu0
        %1258 = vmatprep.mubr.f32.mxu0 0.0
        %1259 = vmatmul.mubr.f32.gmra.mrb[0].mxu0 %v1187
        %v1260 = vpop.f32.mrb[0].mxu0
        %v1261 = vadd.f32 0.0, %v1260
        %v1262 = vpop.f32.mrb[0].mxu0
        %1263 = vdwg.mxu0
        %v1265 = vsel %vm1182, %v1178, 0
        %v1268 = vsel %vm1182, %v1179, 0
        %1270 = vmatprep.subr.mxu0 0.0
        %1271 = vmatpush1.msra.mxu0 %v1095
        %1272 = vmatprep.subr.mxu0 0.0
        %1273 = vmatpush1.msra.mxu0 %v1100
        %1274 = vmatprep.subr.mxu0 0.0
        %1275 = vmatpush1.msra.mxu0 0.0
        %1276 = vmatprep.subr.mxu0 0.0
        %1277 = vmatpush1.msra.mxu0 0.0
        %1278 = vmatprep.subr.mxu0 0.0
        %1279 = vmatpush1.msra.mxu0 0.0
        %1280 = vmatprep.subr.mxu0 0.0
        %1281 = vmatpush1.msra.mxu0 0.0
        %1282 = vmatprep.subr.mxu0 0.0
        %1283 = vmatpush1.msra.mxu0 0.0
        %1284 = vmatprep.subr.mxu0 0.0
        %1285 = vmatpush1.msra.mxu0 0.0
        %1286 = vmatprep.subr.mxu0 0.0
        %1287 = vmatpush1.msra.mxu0 0.0
        %1288 = vmatprep.subr.mxu0 0.0
        %1289 = vmatpush1.msra.mxu0 0.0
        %1290 = vmatprep.subr.mxu0 0.0
        %1291 = vmatpush1.msra.mxu0 0.0
        %1292 = vmatprep.subr.mxu0 0.0
        %1293 = vmatpush1.msra.mxu0 0.0
        %1294 = vmatprep.subr.mxu0 0.0
        %1295 = vmatpush1.msra.mxu0 0.0
        %1296 = vmatprep.subr.mxu0 0.0
        %1297 = vmatpush1.msra.mxu0 0.0
        %1298 = vmatprep.subr.mxu0 0.0
        %1299 = vmatpush1.msra.mxu0 0.0
        %1300 = vmatprep.subr.mxu0 0.0
        %1301 = vmatpush1.msra.mxu0 0.0
        %1302 = vmatprep.subr.mxu0 0.0
        %1303 = vmatpush1.msra.mxu0 0.0
        %1304 = vmatprep.subr.mxu0 0.0
        %1305 = vmatpush1.msra.mxu0 0.0
        %1306 = vmatprep.subr.mxu0 0.0
        %1307 = vmatpush1.msra.mxu0 0.0
        %1308 = vmatprep.subr.mxu0 0.0
        %1309 = vmatpush1.msra.mxu0 0.0
        %1310 = vmatprep.subr.mxu0 0.0
        %1311 = vmatpush1.msra.mxu0 0.0
        %1312 = vmatprep.subr.mxu0 0.0
        %1313 = vmatpush1.msra.mxu0 0.0
        %1314 = vmatprep.subr.mxu0 0.0
        %1315 = vmatpush1.msra.mxu0 0.0
        %1316 = vmatprep.subr.mxu0 0.0
        %1317 = vmatpush1.msra.mxu0 0.0
        %1318 = vmatprep.subr.mxu0 0.0
        %1319 = vmatpush1.msra.mxu0 0.0
        %1320 = vmatprep.subr.mxu0 0.0
        %1321 = vmatpush1.msra.mxu0 0.0
        %1322 = vmatprep.subr.mxu0 0.0
        %1323 = vmatpush1.msra.mxu0 0.0
        %1324 = vmatprep.subr.mxu0 0.0
        %1325 = vmatpush1.msra.mxu0 0.0
        %1326 = vmatprep.subr.mxu0 0.0
        %1327 = vmatpush1.msra.mxu0 0.0
        %1328 = vmatprep.subr.mxu0 0.0
        %1329 = vmatpush1.msra.mxu0 0.0
        %1330 = vmatprep.subr.mxu0 0.0
        %1331 = vmatpush1.msra.mxu0 0.0
        %1332 = vmatprep.subr.mxu0 0.0
        %1333 = vmatpush1.msra.mxu0 0.0
        %1334 = vmatprep.mubr.f32.mxu0 0.0
        %1335 = vmatmul.mubr.f32.gmra.mrb[0].mxu0 %v1265
        %v1336 = vpop.f32.mrb[0].mxu0
        %v1337 = vadd.f32 %v1256, %v1336
        %v1338 = vpop.f32.mrb[0].mxu0
        %1339 = vmatprep.mubr.f32.mxu0 0.0
        %1340 = vmatmul.mubr.f32.gmra.mrb[0].mxu0 %v1268
        %v1341 = vpop.f32.mrb[0].mxu0
        %v1342 = vadd.f32 %v1261, %v1341
        %v1343 = vpop.f32.mrb[0].mxu0
        %1344 = vdwg.mxu0
        %v1345 = vld [vmem:[%s7] sm:$0xff]
        %v1346 = vld [vmem:[%s7 + $0x8] sm:$0xff]
        %v1348 = vsel %vm1182, %v1345, 0
        %v1351 = vsel %vm1182, %v1346, 0
        %1353 = vmatprep.subr.mxu0 0.0
        %1354 = vmatpush1.msra.mxu0 %v1170
        %1355 = vmatprep.subr.mxu0 0.0
        %1356 = vmatpush1.msra.mxu0 %v1175
        %1357 = vmatprep.subr.mxu0 0.0
        %1358 = vmatpush1.msra.mxu0 0.0
        %1359 = vmatprep.subr.mxu0 0.0
        %1360 = vmatpush1.msra.mxu0 0.0
        %1361 = vmatprep.subr.mxu0 0.0
        %1362 = vmatpush1.msra.mxu0 0.0
        %1363 = vmatprep.subr.mxu0 0.0
        %1364 = vmatpush1.msra.mxu0 0.0
        %1365 = vmatprep.subr.mxu0 0.0
        %1366 = vmatpush1.msra.mxu0 0.0
        %1367 = vmatprep.subr.mxu0 0.0
        %1368 = vmatpush1.msra.mxu0 0.0
        %1369 = vmatprep.subr.mxu0 0.0
        %1370 = vmatpush1.msra.mxu0 0.0
        %1371 = vmatprep.subr.mxu0 0.0
        %1372 = vmatpush1.msra.mxu0 0.0
        %1373 = vmatprep.subr.mxu0 0.0
        %1374 = vmatpush1.msra.mxu0 0.0
        %1375 = vmatprep.subr.mxu0 0.0
        %1376 = vmatpush1.msra.mxu0 0.0
        %1377 = vmatprep.subr.mxu0 0.0
        %1378 = vmatpush1.msra.mxu0 0.0
        %1379 = vmatprep.subr.mxu0 0.0
        %1380 = vmatpush1.msra.mxu0 0.0
        %1381 = vmatprep.subr.mxu0 0.0
        %1382 = vmatpush1.msra.mxu0 0.0
        %1383 = vmatprep.subr.mxu0 0.0
        %1384 = vmatpush1.msra.mxu0 0.0
        %1385 = vmatprep.subr.mxu0 0.0
        %1386 = vmatpush1.msra.mxu0 0.0
        %1387 = vmatprep.subr.mxu0 0.0
        %1388 = vmatpush1.msra.mxu0 0.0
        %1389 = vmatprep.subr.mxu0 0.0
        %1390 = vmatpush1.msra.mxu0 0.0
        %1391 = vmatprep.subr.mxu0 0.0
        %1392 = vmatpush1.msra.mxu0 0.0
        %1393 = vmatprep.subr.mxu0 0.0
        %1394 = vmatpush1.msra.mxu0 0.0
        %1395 = vmatprep.subr.mxu0 0.0
        %1396 = vmatpush1.msra.mxu0 0.0
        %1397 = vmatprep.subr.mxu0 0.0
        %1398 = vmatpush1.msra.mxu0 0.0
        %1399 = vmatprep.subr.mxu0 0.0
        %1400 = vmatpush1.msra.mxu0 0.0
        %1401 = vmatprep.subr.mxu0 0.0
        %1402 = vmatpush1.msra.mxu0 0.0
        %1403 = vmatprep.subr.mxu0 0.0
        %1404 = vmatpush1.msra.mxu0 0.0
        %1405 = vmatprep.subr.mxu0 0.0
        %1406 = vmatpush1.msra.mxu0 0.0
        %1407 = vmatprep.subr.mxu0 0.0
        %1408 = vmatpush1.msra.mxu0 0.0
        %1409 = vmatprep.subr.mxu0 0.0
        %1410 = vmatpush1.msra.mxu0 0.0
        %1411 = vmatprep.subr.mxu0 0.0
        %1412 = vmatpush1.msra.mxu0 0.0
        %1413 = vmatprep.subr.mxu0 0.0
        %1414 = vmatpush1.msra.mxu0 0.0
        %1415 = vmatprep.subr.mxu0 0.0
        %1416 = vmatpush1.msra.mxu0 0.0
        %1417 = vmatprep.mubr.f32.mxu0 0.0
        %1418 = vmatmul.mubr.f32.gmra.mrb[0].mxu0 %v1348
        %v1419 = vpop.f32.mrb[0].mxu0
        %v1420 = vadd.f32 0.0, %v1419
        %v1421 = vpop.f32.mrb[0].mxu0
        %1422 = vmatprep.mubr.f32.mxu0 0.0
        %1423 = vmatmul.mubr.f32.gmra.mrb[0].mxu0 %v1351
        %v1424 = vpop.f32.mrb[0].mxu0
        %v1425 = vadd.f32 0.0, %v1424
        %v1426 = vpop.f32.mrb[0].mxu0
        %1427 = vdwg.mxu0
        %v1428 = vadd.f32 %v1337, %v1420
        %v1429 = vadd.f32 %v1342, %v1425
        %v1430 = vld [vmem:[%s8] sm:$0xff]
        %v1431 = vld [vmem:[%s8 + $0x8] sm:$0xff]
        %1433 = vset.pattern.permute.xlu0 0
        %1434 = vperm.xlu0 %1433, %v1430
        %v1435 = vpop.permute.xlu0 %1434
        %1438 = vset.pattern.permute.xlu0 0
        %1439 = vperm.xlu0 %1438, %v1431
        %v1440 = vpop.permute.xlu0 %1439
        %v1442 = vadd.f32 %v1428, %v1435
        %v1443 = vadd.f32 %v1429, %v1440
        %v1444 = vmax.f32 %v1442, 0.0
        %v1445 = vmax.f32 %v1443, 0.0
        %1446 = vmatprep.subr.mxu0 0.0
        %1447 = vmatpush1.msra.mxu0 %v506
        %1448 = vmatprep.subr.mxu0 0.0
        %1449 = vmatpush1.msra.mxu0 %v507
        %1450 = vmatprep.subr.mxu0 0.0
        %1451 = vmatpush1.msra.mxu0 %v508
        %1452 = vmatprep.subr.mxu0 0.0
        %1453 = vmatpush1.msra.mxu0 %v509
        %1454 = vmatprep.subr.mxu0 0.0
        %1455 = vmatpush1.msra.mxu0 %v510
        %1456 = vmatprep.subr.mxu0 0.0
        %1457 = vmatpush1.msra.mxu0 %v511
        %1458 = vmatprep.subr.mxu0 0.0
        %1459 = vmatpush1.msra.mxu0 %v512
        %1460 = vmatprep.subr.mxu0 0.0
        %1461 = vmatpush1.msra.mxu0 %v513
        %1462 = vmatprep.subr.mxu0 0.0
        %1463 = vmatpush1.msra.mxu0 %v514
        %1464 = vmatprep.subr.mxu0 0.0
        %1465 = vmatpush1.msra.mxu0 %v515
        %1466 = vmatprep.subr.mxu0 0.0
        %1467 = vmatpush1.msra.mxu0 %v516
        %1468 = vmatprep.subr.mxu0 0.0
        %1469 = vmatpush1.msra.mxu0 %v517
        %1470 = vmatprep.subr.mxu0 0.0
        %1471 = vmatpush1.msra.mxu0 %v518
        %1472 = vmatprep.subr.mxu0 0.0
        %1473 = vmatpush1.msra.mxu0 %v519
        %1474 = vmatprep.subr.mxu0 0.0
        %1475 = vmatpush1.msra.mxu0 %v520
        %1476 = vmatprep.subr.mxu0 0.0
        %1477 = vmatpush1.msra.mxu0 %v521
        %1478 = vmatprep.subr.mxu0 0.0
        %1479 = vmatpush1.msra.mxu0 0.0
        %1480 = vmatprep.subr.mxu0 0.0
        %1481 = vmatpush1.msra.mxu0 0.0
        %1482 = vmatprep.subr.mxu0 0.0
        %1483 = vmatpush1.msra.mxu0 0.0
        %1484 = vmatprep.subr.mxu0 0.0
        %1485 = vmatpush1.msra.mxu0 0.0
        %1486 = vmatprep.subr.mxu0 0.0
        %1487 = vmatpush1.msra.mxu0 0.0
        %1488 = vmatprep.subr.mxu0 0.0
        %1489 = vmatpush1.msra.mxu0 0.0
        %1490 = vmatprep.subr.mxu0 0.0
        %1491 = vmatpush1.msra.mxu0 0.0
        %1492 = vmatprep.subr.mxu0 0.0
        %1493 = vmatpush1.msra.mxu0 0.0
        %1494 = vmatprep.subr.mxu0 0.0
        %1495 = vmatpush1.msra.mxu0 0.0
        %1496 = vmatprep.subr.mxu0 0.0
        %1497 = vmatpush1.msra.mxu0 0.0
        %1498 = vmatprep.subr.mxu0 0.0
        %1499 = vmatpush1.msra.mxu0 0.0
        %1500 = vmatprep.subr.mxu0 0.0
        %1501 = vmatpush1.msra.mxu0 0.0
        %1502 = vmatprep.subr.mxu0 0.0
        %1503 = vmatpush1.msra.mxu0 0.0
        %1504 = vmatprep.subr.mxu0 0.0
        %1505 = vmatpush1.msra.mxu0 0.0
        %1506 = vmatprep.subr.mxu0 0.0
        %1507 = vmatpush1.msra.mxu0 0.0
        %1508 = vmatprep.subr.mxu0 0.0
        %1509 = vmatpush1.msra.mxu0 0.0
        %1510 = vmatprep.mubr.f32.mxu0 0.0
        %1511 = vmatmul.mubr.f32.gmra.mrb[0].mxu0 %v1444
        %v1512 = vpop.f32.mrb[0].mxu0
        %v1513 = vadd.f32 0.0, %v1512
        %v1514 = vpop.f32.mrb[0].mxu0
        %1515 = vmatprep.mubr.f32.mxu0 0.0
        %1516 = vmatmul.mubr.f32.gmra.mrb[0].mxu0 %v1445
        %v1517 = vpop.f32.mrb[0].mxu0
        %v1518 = vadd.f32 0.0, %v1517
        %v1519 = vpop.f32.mrb[0].mxu0
        %1520 = vdwg.mxu0
        %1521 = vmatprep.subr.mxu0 0.0
        %1522 = vmatpush1.msra.mxu0 %v570
        %1523 = vmatprep.subr.mxu0 0.0
        %1524 = vmatpush1.msra.mxu0 %v571
        %1525 = vmatprep.subr.mxu0 0.0
        %1526 = vmatpush1.msra.mxu0 %v572
        %1527 = vmatprep.subr.mxu0 0.0
        %1528 = vmatpush1.msra.mxu0 %v573
        %1529 = vmatprep.subr.mxu0 0.0
        %1530 = vmatpush1.msra.mxu0 %v574
        %1531 = vmatprep.subr.mxu0 0.0
        %1532 = vmatpush1.msra.mxu0 %v575
        %1533 = vmatprep.subr.mxu0 0.0
        %1534 = vmatpush1.msra.mxu0 %v576
        %1535 = vmatprep.subr.mxu0 0.0
        %1536 = vmatpush1.msra.mxu0 %v577
        %1537 = vmatprep.subr.mxu0 0.0
        %1538 = vmatpush1.msra.mxu0 %v578
        %1539 = vmatprep.subr.mxu0 0.0
        %1540 = vmatpush1.msra.mxu0 %v579
        %1541 = vmatprep.subr.mxu0 0.0
        %1542 = vmatpush1.msra.mxu0 %v580
        %1543 = vmatprep.subr.mxu0 0.0
        %1544 = vmatpush1.msra.mxu0 %v581
        %1545 = vmatprep.subr.mxu0 0.0
        %1546 = vmatpush1.msra.mxu0 %v582
        %1547 = vmatprep.subr.mxu0 0.0
        %1548 = vmatpush1.msra.mxu0 %v583
        %1549 = vmatprep.subr.mxu0 0.0
        %1550 = vmatpush1.msra.mxu0 %v584
        %1551 = vmatprep.subr.mxu0 0.0
        %1552 = vmatpush1.msra.mxu0 %v585
        %1553 = vmatprep.subr.mxu0 0.0
        %1554 = vmatpush1.msra.mxu0 0.0
        %1555 = vmatprep.subr.mxu0 0.0
        %1556 = vmatpush1.msra.mxu0 0.0
        %1557 = vmatprep.subr.mxu0 0.0
        %1558 = vmatpush1.msra.mxu0 0.0
        %1559 = vmatprep.subr.mxu0 0.0
        %1560 = vmatpush1.msra.mxu0 0.0
        %1561 = vmatprep.subr.mxu0 0.0
        %1562 = vmatpush1.msra.mxu0 0.0
        %1563 = vmatprep.subr.mxu0 0.0
        %1564 = vmatpush1.msra.mxu0 0.0
        %1565 = vmatprep.subr.mxu0 0.0
        %1566 = vmatpush1.msra.mxu0 0.0
        %1567 = vmatprep.subr.mxu0 0.0
        %1568 = vmatpush1.msra.mxu0 0.0
        %1569 = vmatprep.subr.mxu0 0.0
        %1570 = vmatpush1.msra.mxu0 0.0
        %1571 = vmatprep.subr.mxu0 0.0
        %1572 = vmatpush1.msra.mxu0 0.0
        %1573 = vmatprep.subr.mxu0 0.0
        %1574 = vmatpush1.msra.mxu0 0.0
        %1575 = vmatprep.subr.mxu0 0.0
        %1576 = vmatpush1.msra.mxu0 0.0
        %1577 = vmatprep.subr.mxu0 0.0
        %1578 = vmatpush1.msra.mxu0 0.0
        %1579 = vmatprep.subr.mxu0 0.0
        %1580 = vmatpush1.msra.mxu0 0.0
        %1581 = vmatprep.subr.mxu0 0.0
        %1582 = vmatpush1.msra.mxu0 0.0
        %1583 = vmatprep.subr.mxu0 0.0
        %1584 = vmatpush1.msra.mxu0 0.0
        %1585 = vmatprep.mubr.f32.mxu0 0.0
        %1586 = vmatmul.mubr.f32.gmra.mrb[0].mxu0 %v1444
        %v1587 = vpop.f32.mrb[0].mxu0
        %v1588 = vadd.f32 0.0, %v1587
        %v1589 = vpop.f32.mrb[0].mxu0
        %1590 = vmatprep.mubr.f32.mxu0 0.0
        %1591 = vmatmul.mubr.f32.gmra.mrb[0].mxu0 %v1445
        %v1592 = vpop.f32.mrb[0].mxu0
        %v1593 = vadd.f32 0.0, %v1592
        %v1594 = vpop.f32.mrb[0].mxu0
        %1595 = vdwg.mxu0
        %v1596 = vld [vmem:[%s9] sm:$0xff]
        %v1597 = vld [vmem:[%s9 + $0x8] sm:$0xff]
        %v1598 = vld [vmem:[%s9 + $0x10] sm:$0xff]
        %v1599 = vld [vmem:[%s9 + $0x18] sm:$0xff]
        %v1600 = vld [vmem:[%s10] sm:$0xff]
        %v1601 = vld [vmem:[%s10 + $0x8] sm:$0xff]
        %v1602 = vld [vmem:[%s10 + $0x10] sm:$0xff]
        %v1603 = vld [vmem:[%s10 + $0x18] sm:$0xff]
        %v1605 = vsel %vm1182, %v1600, 0
        %v1608 = vsel %vm1182, %v1601, 0
        %v1611 = vsel %vm1182, %v1602, 0
        %v1614 = vsel %vm1182, %v1603, 0
        %1616 = vmatprep.subr.mxu0 0.0
        %1617 = vmatpush1.msra.mxu0 %v1444
        %1618 = vmatprep.subr.mxu0 0.0
        %1619 = vmatpush1.msra.mxu0 %v1445
        %1620 = vmatprep.subr.mxu0 0.0
        %1621 = vmatpush1.msra.mxu0 0.0
        %1622 = vmatprep.subr.mxu0 0.0
        %1623 = vmatpush1.msra.mxu0 0.0
        %1624 = vmatprep.subr.mxu0 0.0
        %1625 = vmatpush1.msra.mxu0 0.0
        %1626 = vmatprep.subr.mxu0 0.0
        %1627 = vmatpush1.msra.mxu0 0.0
        %1628 = vmatprep.subr.mxu0 0.0
        %1629 = vmatpush1.msra.mxu0 0.0
        %1630 = vmatprep.subr.mxu0 0.0
        %1631 = vmatpush1.msra.mxu0 0.0
        %1632 = vmatprep.subr.mxu0 0.0
        %1633 = vmatpush1.msra.mxu0 0.0
        %1634 = vmatprep.subr.mxu0 0.0
        %1635 = vmatpush1.msra.mxu0 0.0
        %1636 = vmatprep.subr.mxu0 0.0
        %1637 = vmatpush1.msra.mxu0 0.0
        %1638 = vmatprep.subr.mxu0 0.0
        %1639 = vmatpush1.msra.mxu0 0.0
        %1640 = vmatprep.subr.mxu0 0.0
        %1641 = vmatpush1.msra.mxu0 0.0
        %1642 = vmatprep.subr.mxu0 0.0
        %1643 = vmatpush1.msra.mxu0 0.0
        %1644 = vmatprep.subr.mxu0 0.0
        %1645 = vmatpush1.msra.mxu0 0.0
        %1646 = vmatprep.subr.mxu0 0.0
        %1647 = vmatpush1.msra.mxu0 0.0
        %1648 = vmatprep.subr.mxu0 0.0
        %1649 = vmatpush1.msra.mxu0 0.0
        %1650 = vmatprep.subr.mxu0 0.0
        %1651 = vmatpush1.msra.mxu0 0.0
        %1652 = vmatprep.subr.mxu0 0.0
        %1653 = vmatpush1.msra.mxu0 0.0
        %1654 = vmatprep.subr.mxu0 0.0
        %1655 = vmatpush1.msra.mxu0 0.0
        %1656 = vmatprep.subr.mxu0 0.0
        %1657 = vmatpush1.msra.mxu0 0.0
        %1658 = vmatprep.subr.mxu0 0.0
        %1659 = vmatpush1.msra.mxu0 0.0
        %1660 = vmatprep.subr.mxu0 0.0
        %1661 = vmatpush1.msra.mxu0 0.0
        %1662 = vmatprep.subr.mxu0 0.0
        %1663 = vmatpush1.msra.mxu0 0.0
        %1664 = vmatprep.subr.mxu0 0.0
        %1665 = vmatpush1.msra.mxu0 0.0
        %1666 = vmatprep.subr.mxu0 0.0
        %1667 = vmatpush1.msra.mxu0 0.0
        %1668 = vmatprep.subr.mxu0 0.0
        %1669 = vmatpush1.msra.mxu0 0.0
        %1670 = vmatprep.subr.mxu0 0.0
        %1671 = vmatpush1.msra.mxu0 0.0
        %1672 = vmatprep.subr.mxu0 0.0
        %1673 = vmatpush1.msra.mxu0 0.0
        %1674 = vmatprep.subr.mxu0 0.0
        %1675 = vmatpush1.msra.mxu0 0.0
        %1676 = vmatprep.subr.mxu0 0.0
        %1677 = vmatpush1.msra.mxu0 0.0
        %1678 = vmatprep.subr.mxu0 0.0
        %1679 = vmatpush1.msra.mxu0 0.0
        %1680 = vmatprep.mubr.f32.mxu0 0.0
        %1681 = vmatmul.mubr.f32.gmra.mrb[0].mxu0 %v1605
        %v1682 = vpop.f32.mrb[0].mxu0
        %v1683 = vadd.f32 0.0, %v1682
        %v1684 = vpop.f32.mrb[0].mxu0
        %1685 = vmatprep.mubr.f32.mxu0 0.0
        %1686 = vmatmul.mubr.f32.gmra.mrb[0].mxu0 %v1608
        %v1687 = vpop.f32.mrb[0].mxu0
        %v1688 = vadd.f32 0.0, %v1687
        %v1689 = vpop.f32.mrb[0].mxu0
        %1690 = vmatprep.mubr.f32.mxu0 0.0
        %1691 = vmatmul.mubr.f32.gmra.mrb[0].mxu0 %v1611
        %v1692 = vpop.f32.mrb[0].mxu0
        %v1693 = vadd.f32 0.0, %v1692
        %v1694 = vpop.f32.mrb[0].mxu0
        %1695 = vmatprep.mubr.f32.mxu0 0.0
        %1696 = vmatmul.mubr.f32.gmra.mrb[0].mxu0 %v1614
        %v1697 = vpop.f32.mrb[0].mxu0
        %v1698 = vadd.f32 0.0, %v1697
        %v1699 = vpop.f32.mrb[0].mxu0
        %1700 = vdwg.mxu0
        %v1702 = vsel %vm1182, %v1596, 0
        %v1705 = vsel %vm1182, %v1597, 0
        %v1708 = vsel %vm1182, %v1598, 0
        %v1711 = vsel %vm1182, %v1599, 0
        %1713 = vmatprep.subr.mxu0 0.0
        %1714 = vmatpush1.msra.mxu0 %v1513
        %1715 = vmatprep.subr.mxu0 0.0
        %1716 = vmatpush1.msra.mxu0 %v1518
        %1717 = vmatprep.subr.mxu0 0.0
        %1718 = vmatpush1.msra.mxu0 0.0
        %1719 = vmatprep.subr.mxu0 0.0
        %1720 = vmatpush1.msra.mxu0 0.0
        %1721 = vmatprep.subr.mxu0 0.0
        %1722 = vmatpush1.msra.mxu0 0.0
        %1723 = vmatprep.subr.mxu0 0.0
        %1724 = vmatpush1.msra.mxu0 0.0
        %1725 = vmatprep.subr.mxu0 0.0
        %1726 = vmatpush1.msra.mxu0 0.0
        %1727 = vmatprep.subr.mxu0 0.0
        %1728 = vmatpush1.msra.mxu0 0.0
        %1729 = vmatprep.subr.mxu0 0.0
        %1730 = vmatpush1.msra.mxu0 0.0
        %1731 = vmatprep.subr.mxu0 0.0
        %1732 = vmatpush1.msra.mxu0 0.0
        %1733 = vmatprep.subr.mxu0 0.0
        %1734 = vmatpush1.msra.mxu0 0.0
        %1735 = vmatprep.subr.mxu0 0.0
        %1736 = vmatpush1.msra.mxu0 0.0
        %1737 = vmatprep.subr.mxu0 0.0
        %1738 = vmatpush1.msra.mxu0 0.0
        %1739 = vmatprep.subr.mxu0 0.0
        %1740 = vmatpush1.msra.mxu0 0.0
        %1741 = vmatprep.subr.mxu0 0.0
        %1742 = vmatpush1.msra.mxu0 0.0
        %1743 = vmatprep.subr.mxu0 0.0
        %1744 = vmatpush1.msra.mxu0 0.0
        %1745 = vmatprep.subr.mxu0 0.0
        %1746 = vmatpush1.msra.mxu0 0.0
        %1747 = vmatprep.subr.mxu0 0.0
        %1748 = vmatpush1.msra.mxu0 0.0
        %1749 = vmatprep.subr.mxu0 0.0
        %1750 = vmatpush1.msra.mxu0 0.0
        %1751 = vmatprep.subr.mxu0 0.0
        %1752 = vmatpush1.msra.mxu0 0.0
        %1753 = vmatprep.subr.mxu0 0.0
        %1754 = vmatpush1.msra.mxu0 0.0
        %1755 = vmatprep.subr.mxu0 0.0
        %1756 = vmatpush1.msra.mxu0 0.0
        %1757 = vmatprep.subr.mxu0 0.0
        %1758 = vmatpush1.msra.mxu0 0.0
        %1759 = vmatprep.subr.mxu0 0.0
        %1760 = vmatpush1.msra.mxu0 0.0
        %1761 = vmatprep.subr.mxu0 0.0
        %1762 = vmatpush1.msra.mxu0 0.0
        %1763 = vmatprep.subr.mxu0 0.0
        %1764 = vmatpush1.msra.mxu0 0.0
        %1765 = vmatprep.subr.mxu0 0.0
        %1766 = vmatpush1.msra.mxu0 0.0
        %1767 = vmatprep.subr.mxu0 0.0
        %1768 = vmatpush1.msra.mxu0 0.0
        %1769 = vmatprep.subr.mxu0 0.0
        %1770 = vmatpush1.msra.mxu0 0.0
        %1771 = vmatprep.subr.mxu0 0.0
        %1772 = vmatpush1.msra.mxu0 0.0
        %1773 = vmatprep.subr.mxu0 0.0
        %1774 = vmatpush1.msra.mxu0 0.0
        %1775 = vmatprep.subr.mxu0 0.0
        %1776 = vmatpush1.msra.mxu0 0.0
        %1777 = vmatprep.mubr.f32.mxu0 0.0
        %1778 = vmatmul.mubr.f32.gmra.mrb[0].mxu0 %v1702
        %v1779 = vpop.f32.mrb[0].mxu0
        %v1780 = vadd.f32 %v1683, %v1779
        %v1781 = vpop.f32.mrb[0].mxu0
        %1782 = vmatprep.mubr.f32.mxu0 0.0
        %1783 = vmatmul.mubr.f32.gmra.mrb[0].mxu0 %v1705
        %v1784 = vpop.f32.mrb[0].mxu0
        %v1785 = vadd.f32 %v1688, %v1784
        %v1786 = vpop.f32.mrb[0].mxu0
        %1787 = vmatprep.mubr.f32.mxu0 0.0
        %1788 = vmatmul.mubr.f32.gmra.mrb[0].mxu0 %v1708
        %v1789 = vpop.f32.mrb[0].mxu0
        %v1790 = vadd.f32 %v1693, %v1789
        %v1791 = vpop.f32.mrb[0].mxu0
        %1792 = vmatprep.mubr.f32.mxu0 0.0
        %1793 = vmatmul.mubr.f32.gmra.mrb[0].mxu0 %v1711
        %v1794 = vpop.f32.mrb[0].mxu0
        %v1795 = vadd.f32 %v1698, %v1794
        %v1796 = vpop.f32.mrb[0].mxu0
        %1797 = vdwg.mxu0
        %v1798 = vld [vmem:[%s11] sm:$0xff]
        %v1799 = vld [vmem:[%s11 + $0x8] sm:$0xff]
        %v1800 = vld [vmem:[%s11 + $0x10] sm:$0xff]
        %v1801 = vld [vmem:[%s11 + $0x18] sm:$0xff]
        %v1803 = vsel %vm1182, %v1798, 0
        %v1806 = vsel %vm1182, %v1799, 0
        %v1809 = vsel %vm1182, %v1800, 0
        %v1812 = vsel %vm1182, %v1801, 0
        %1814 = vmatprep.subr.mxu0 0.0
        %1815 = vmatpush1.msra.mxu0 %v1588
        %1816 = vmatprep.subr.mxu0 0.0
        %1817 = vmatpush1.msra.mxu0 %v1593
        %1818 = vmatprep.subr.mxu0 0.0
        %1819 = vmatpush1.msra.mxu0 0.0
        %1820 = vmatprep.subr.mxu0 0.0
        %1821 = vmatpush1.msra.mxu0 0.0
        %1822 = vmatprep.subr.mxu0 0.0
        %1823 = vmatpush1.msra.mxu0 0.0
        %1824 = vmatprep.subr.mxu0 0.0
        %1825 = vmatpush1.msra.mxu0 0.0
        %1826 = vmatprep.subr.mxu0 0.0
        %1827 = vmatpush1.msra.mxu0 0.0
        %1828 = vmatprep.subr.mxu0 0.0
        %1829 = vmatpush1.msra.mxu0 0.0
        %1830 = vmatprep.subr.mxu0 0.0
        %1831 = vmatpush1.msra.mxu0 0.0
        %1832 = vmatprep.subr.mxu0 0.0
        %1833 = vmatpush1.msra.mxu0 0.0
        %1834 = vmatprep.subr.mxu0 0.0
        %1835 = vmatpush1.msra.mxu0 0.0
        %1836 = vmatprep.subr.mxu0 0.0
        %1837 = vmatpush1.msra.mxu0 0.0
        %1838 = vmatprep.subr.mxu0 0.0
        %1839 = vmatpush1.msra.mxu0 0.0
        %1840 = vmatprep.subr.mxu0 0.0
        %1841 = vmatpush1.msra.mxu0 0.0
        %1842 = vmatprep.subr.mxu0 0.0
        %1843 = vmatpush1.msra.mxu0 0.0
        %1844 = vmatprep.subr.mxu0 0.0
        %1845 = vmatpush1.msra.mxu0 0.0
        %1846 = vmatprep.subr.mxu0 0.0
        %1847 = vmatpush1.msra.mxu0 0.0
        %1848 = vmatprep.subr.mxu0 0.0
        %1849 = vmatpush1.msra.mxu0 0.0
        %1850 = vmatprep.subr.mxu0 0.0
        %1851 = vmatpush1.msra.mxu0 0.0
        %1852 = vmatprep.subr.mxu0 0.0
        %1853 = vmatpush1.msra.mxu0 0.0
        %1854 = vmatprep.subr.mxu0 0.0
        %1855 = vmatpush1.msra.mxu0 0.0
        %1856 = vmatprep.subr.mxu0 0.0
        %1857 = vmatpush1.msra.mxu0 0.0
        %1858 = vmatprep.subr.mxu0 0.0
        %1859 = vmatpush1.msra.mxu0 0.0
        %1860 = vmatprep.subr.mxu0 0.0
        %1861 = vmatpush1.msra.mxu0 0.0
        %1862 = vmatprep.subr.mxu0 0.0
        %1863 = vmatpush1.msra.mxu0 0.0
        %1864 = vmatprep.subr.mxu0 0.0
        %1865 = vmatpush1.msra.mxu0 0.0
        %1866 = vmatprep.subr.mxu0 0.0
        %1867 = vmatpush1.msra.mxu0 0.0
        %1868 = vmatprep.subr.mxu0 0.0
        %1869 = vmatpush1.msra.mxu0 0.0
        %1870 = vmatprep.subr.mxu0 0.0
        %1871 = vmatpush1.msra.mxu0 0.0
        %1872 = vmatprep.subr.mxu0 0.0
        %1873 = vmatpush1.msra.mxu0 0.0
        %1874 = vmatprep.subr.mxu0 0.0
        %1875 = vmatpush1.msra.mxu0 0.0
        %1876 = vmatprep.subr.mxu0 0.0
        %1877 = vmatpush1.msra.mxu0 0.0
        %1878 = vmatprep.mubr.f32.mxu0 0.0
        %1879 = vmatmul.mubr.f32.gmra.mrb[0].mxu0 %v1803
        %v1880 = vpop.f32.mrb[0].mxu0
        %v1881 = vadd.f32 0.0, %v1880
        %v1882 = vpop.f32.mrb[0].mxu0
        %1883 = vmatprep.mubr.f32.mxu0 0.0
        %1884 = vmatmul.mubr.f32.gmra.mrb[0].mxu0 %v1806
        %v1885 = vpop.f32.mrb[0].mxu0
        %v1886 = vadd.f32 0.0, %v1885
        %v1887 = vpop.f32.mrb[0].mxu0
        %1888 = vmatprep.mubr.f32.mxu0 0.0
        %1889 = vmatmul.mubr.f32.gmra.mrb[0].mxu0 %v1809
        %v1890 = vpop.f32.mrb[0].mxu0
        %v1891 = vadd.f32 0.0, %v1890
        %v1892 = vpop.f32.mrb[0].mxu0
        %1893 = vmatprep.mubr.f32.mxu0 0.0
        %1894 = vmatmul.mubr.f32.gmra.mrb[0].mxu0 %v1812
        %v1895 = vpop.f32.mrb[0].mxu0
        %v1896 = vadd.f32 0.0, %v1895
        %v1897 = vpop.f32.mrb[0].mxu0
        %1898 = vdwg.mxu0
        %v1899 = vadd.f32 %v1780, %v1881
        %v1900 = vadd.f32 %v1785, %v1886
        %v1901 = vadd.f32 %v1790, %v1891
        %v1902 = vadd.f32 %v1795, %v1896
        %v1903 = vld [vmem:[%s12] sm:$0xff]
        %v1904 = vld [vmem:[%s12 + $0x8] sm:$0xff]
        %v1905 = vld [vmem:[%s12 + $0x10] sm:$0xff]
        %v1906 = vld [vmem:[%s12 + $0x18] sm:$0xff]
        %1908 = vset.pattern.permute.xlu0 0
        %1909 = vperm.xlu0 %1908, %v1903
        %v1910 = vpop.permute.xlu0 %1909
        %1913 = vset.pattern.permute.xlu0 0
        %1914 = vperm.xlu0 %1913, %v1904
        %v1915 = vpop.permute.xlu0 %1914
        %1918 = vset.pattern.permute.xlu0 0
        %1919 = vperm.xlu0 %1918, %v1905
        %v1920 = vpop.permute.xlu0 %1919
        %1923 = vset.pattern.permute.xlu0 0
        %1924 = vperm.xlu0 %1923, %v1906
        %v1925 = vpop.permute.xlu0 %1924
        %v1927 = vadd.f32 %v1899, %v1910
        %v1928 = vadd.f32 %v1900, %v1915
        %v1929 = vadd.f32 %v1901, %v1920
        %v1930 = vadd.f32 %v1902, %v1925
        %v1931 = vadd.f32 %v586, %v1927
        %v1932 = vadd.f32 %v587, %v1928
        %v1933 = vadd.f32 %v588, %v1929
        %v1934 = vadd.f32 %v589, %v1930
        %1935 = vadd.xlane.f32.xlu0 %v1931
        %v1936 = vpop.xlane.xlu0 %1935
        %1937 = vadd.xlane.f32.xlu0 %v1932
        %v1938 = vpop.xlane.xlu0 %1937
        %1939 = vadd.xlane.f32.xlu0 %v1933
        %v1940 = vpop.xlane.xlu0 %1939
        %1941 = vadd.xlane.f32.xlu0 %v1934
        %v1942 = vpop.xlane.xlu0 %1941
        %v1943 = vrcp.pop 128.0
        %v1944 = vmul.f32 %v1936, %v1943
        %v1945 = vmul.f32 %v1938, %v1943
        %v1946 = vmul.f32 %v1940, %v1943
        %v1947 = vmul.f32 %v1942, %v1943
        %v1948 = vsub.f32 %v1931, %v1944
        %v1949 = vsub.f32 %v1932, %v1945
        %v1950 = vsub.f32 %v1933, %v1946
        %v1951 = vsub.f32 %v1934, %v1947
        %v1952 = vmul.f32 %v1948, %v1948
        %v1953 = vmul.f32 %v1949, %v1949
        %v1954 = vmul.f32 %v1950, %v1950
        %v1955 = vmul.f32 %v1951, %v1951
        %1956 = vadd.xlane.f32.xlu0 %v1952
        %v1957 = vpop.xlane.xlu0 %1956
        %1958 = vadd.xlane.f32.xlu0 %v1953
        %v1959 = vpop.xlane.xlu0 %1958
        %1960 = vadd.xlane.f32.xlu0 %v1954
        %v1961 = vpop.xlane.xlu0 %1960
        %1962 = vadd.xlane.f32.xlu0 %v1955
        %v1963 = vpop.xlane.xlu0 %1962
        %v1964 = vmul.f32 %v1957, %v1943
        %v1965 = vmul.f32 %v1959, %v1943
        %v1966 = vmul.f32 %v1961, %v1943
        %v1967 = vmul.f32 %v1963, %v1943
        %v1968 = vadd.f32 %v1964, 1e-05
        %v1969 = vadd.f32 %v1965, 1e-05
        %v1970 = vadd.f32 %v1966, 1e-05
        %v1971 = vadd.f32 %v1967, 1e-05
        %v1972 = vrsqrt.pop %v1968
        %v1973 = vmul.f32 %v1968, %v1972
        %vm1974 = vcmp.eq.f32.partialorder %v1968, inf
        %v1975 = vsel %vm1974, %v1968, %v1973
        %vm1976 = vcmp.eq.f32.partialorder %v1968, 0.0
        %v1977 = vand.u32 %v1968, 2147483648
        %v1978 = vsel %vm1976, %v1977, %v1975
        %v1979 = vrsqrt.pop %v1969
        %v1980 = vmul.f32 %v1969, %v1979
        %vm1981 = vcmp.eq.f32.partialorder %v1969, inf
        %v1982 = vsel %vm1981, %v1969, %v1980
        %vm1983 = vcmp.eq.f32.partialorder %v1969, 0.0
        %v1984 = vand.u32 %v1969, 2147483648
        %v1985 = vsel %vm1983, %v1984, %v1982
        %v1986 = vrsqrt.pop %v1970
        %v1987 = vmul.f32 %v1970, %v1986
        %vm1988 = vcmp.eq.f32.partialorder %v1970, inf
        %v1989 = vsel %vm1988, %v1970, %v1987
        %vm1990 = vcmp.eq.f32.partialorder %v1970, 0.0
        %v1991 = vand.u32 %v1970, 2147483648
        %v1992 = vsel %vm1990, %v1991, %v1989
        %v1993 = vrsqrt.pop %v1971
        %v1994 = vmul.f32 %v1971, %v1993
        %vm1995 = vcmp.eq.f32.partialorder %v1971, inf
        %v1996 = vsel %vm1995, %v1971, %v1994
        %vm1997 = vcmp.eq.f32.partialorder %v1971, 0.0
        %v1998 = vand.u32 %v1971, 2147483648
        %v1999 = vsel %vm1997, %v1998, %v1996
        %v2000 = vrcp.pop %v1978
        %v2001 = vmul.f32 %v1948, %v2000
        %v2002 = vrcp.pop %v1985
        %v2003 = vmul.f32 %v1949, %v2002
        %v2004 = vrcp.pop %v1992
        %v2005 = vmul.f32 %v1950, %v2004
        %v2006 = vrcp.pop %v1999
        %v2007 = vmul.f32 %v1951, %v2006
        %v2008 = vmax.f32 %v2001, 0.0
        %v2009 = vmax.f32 %v2003, 0.0
        %v2010 = vmax.f32 %v2005, 0.0
        %v2011 = vmax.f32 %v2007, 0.0
        %v2012 = vmul.u32 %v457, 2
        %vm2013 = vcmp.eq.s32.totalorder %v440, %v2012
        %vm2014 = vcmp.eq.s32.totalorder %v441, %v2012
        %vm2015 = vcmp.eq.s32.totalorder %v442, %v2012
        %vm2016 = vcmp.eq.s32.totalorder %v443, %v2012
        %vm2017 = vcmp.eq.s32.totalorder %v444, %v2012
        %vm2018 = vcmp.eq.s32.totalorder %v445, %v2012
        %vm2019 = vcmp.eq.s32.totalorder %v446, %v2012
        %vm2020 = vcmp.eq.s32.totalorder %v447, %v2012
        %vm2021 = vcmp.eq.s32.totalorder %v448, %v2012
        %vm2022 = vcmp.eq.s32.totalorder %v449, %v2012
        %vm2023 = vcmp.eq.s32.totalorder %v450, %v2012
        %vm2024 = vcmp.eq.s32.totalorder %v451, %v2012
        %vm2025 = vcmp.eq.s32.totalorder %v452, %v2012
        %vm2026 = vcmp.eq.s32.totalorder %v453, %v2012
        %vm2027 = vcmp.eq.s32.totalorder %v454, %v2012
        %vm2028 = vcmp.eq.s32.totalorder %v455, %v2012
        %v2029 = vsel %vm2013, 1, 0
        %v2030 = vsel %vm2014, 1, 0
        %v2031 = vsel %vm2015, 1, 0
        %v2032 = vsel %vm2016, 1, 0
        %v2033 = vsel %vm2017, 1, 0
        %v2034 = vsel %vm2018, 1, 0
        %v2035 = vsel %vm2019, 1, 0
        %v2036 = vsel %vm2020, 1, 0
        %v2037 = vsel %vm2021, 1, 0
        %v2038 = vsel %vm2022, 1, 0
        %v2039 = vsel %vm2023, 1, 0
        %v2040 = vsel %vm2024, 1, 0
        %v2041 = vsel %vm2025, 1, 0
        %v2042 = vsel %vm2026, 1, 0
        %v2043 = vsel %vm2027, 1, 0
        %v2044 = vsel %vm2028, 1, 0
        %v2045 = vcvt.s32.f32 %v2029
        %v2046 = vcvt.s32.f32 %v2030
        %v2047 = vcvt.s32.f32 %v2031
        %v2048 = vcvt.s32.f32 %v2032
        %v2049 = vcvt.s32.f32 %v2033
        %v2050 = vcvt.s32.f32 %v2034
        %v2051 = vcvt.s32.f32 %v2035
        %v2052 = vcvt.s32.f32 %v2036
        %v2053 = vcvt.s32.f32 %v2037
        %v2054 = vcvt.s32.f32 %v2038
        %v2055 = vcvt.s32.f32 %v2039
        %v2056 = vcvt.s32.f32 %v2040
        %v2057 = vcvt.s32.f32 %v2041
        %v2058 = vcvt.s32.f32 %v2042
        %v2059 = vcvt.s32.f32 %v2043
        %v2060 = vcvt.s32.f32 %v2044
        %v2061 = vadd.s32 %v2012, 1
        %vm2062 = vcmp.eq.s32.totalorder %v440, %v2061
        %vm2063 = vcmp.eq.s32.totalorder %v441, %v2061
        %vm2064 = vcmp.eq.s32.totalorder %v442, %v2061
        %vm2065 = vcmp.eq.s32.totalorder %v443, %v2061
        %vm2066 = vcmp.eq.s32.totalorder %v444, %v2061
        %vm2067 = vcmp.eq.s32.totalorder %v445, %v2061
        %vm2068 = vcmp.eq.s32.totalorder %v446, %v2061
        %vm2069 = vcmp.eq.s32.totalorder %v447, %v2061
        %vm2070 = vcmp.eq.s32.totalorder %v448, %v2061
        %vm2071 = vcmp.eq.s32.totalorder %v449, %v2061
        %vm2072 = vcmp.eq.s32.totalorder %v450, %v2061
        %vm2073 = vcmp.eq.s32.totalorder %v451, %v2061
        %vm2074 = vcmp.eq.s32.totalorder %v452, %v2061
        %vm2075 = vcmp.eq.s32.totalorder %v453, %v2061
        %vm2076 = vcmp.eq.s32.totalorder %v454, %v2061
        %vm2077 = vcmp.eq.s32.totalorder %v455, %v2061
        %v2078 = vsel %vm2062, 1, 0
        %v2079 = vsel %vm2063, 1, 0
        %v2080 = vsel %vm2064, 1, 0
        %v2081 = vsel %vm2065, 1, 0
        %v2082 = vsel %vm2066, 1, 0
        %v2083 = vsel %vm2067, 1, 0
        %v2084 = vsel %vm2068, 1, 0
        %v2085 = vsel %vm2069, 1, 0
        %v2086 = vsel %vm2070, 1, 0
        %v2087 = vsel %vm2071, 1, 0
        %v2088 = vsel %vm2072, 1, 0
        %v2089 = vsel %vm2073, 1, 0
        %v2090 = vsel %vm2074, 1, 0
        %v2091 = vsel %vm2075, 1, 0
        %v2092 = vsel %vm2076, 1, 0
        %v2093 = vsel %vm2077, 1, 0
        %v2094 = vcvt.s32.f32 %v2078
        %v2095 = vcvt.s32.f32 %v2079
        %v2096 = vcvt.s32.f32 %v2080
        %v2097 = vcvt.s32.f32 %v2081
        %v2098 = vcvt.s32.f32 %v2082
        %v2099 = vcvt.s32.f32 %v2083
        %v2100 = vcvt.s32.f32 %v2084
        %v2101 = vcvt.s32.f32 %v2085
        %v2102 = vcvt.s32.f32 %v2086
        %v2103 = vcvt.s32.f32 %v2087
        %v2104 = vcvt.s32.f32 %v2088
        %v2105 = vcvt.s32.f32 %v2089
        %v2106 = vcvt.s32.f32 %v2090
        %v2107 = vcvt.s32.f32 %v2091
        %v2108 = vcvt.s32.f32 %v2092
        %v2109 = vcvt.s32.f32 %v2093
        %2110 = vmatprep.subr.mxu0 0.0
        %2111 = vmatpush1.msra.mxu0 %v2045
        %2112 = vmatprep.subr.mxu0 0.0
        %2113 = vmatpush1.msra.mxu0 %v2046
        %2114 = vmatprep.subr.mxu0 0.0
        %2115 = vmatpush1.msra.mxu0 %v2047
        %2116 = vmatprep.subr.mxu0 0.0
        %2117 = vmatpush1.msra.mxu0 %v2048
        %2118 = vmatprep.subr.mxu0 0.0
        %2119 = vmatpush1.msra.mxu0 %v2049
        %2120 = vmatprep.subr.mxu0 0.0
        %2121 = vmatpush1.msra.mxu0 %v2050
        %2122 = vmatprep.subr.mxu0 0.0
        %2123 = vmatpush1.msra.mxu0 %v2051
        %2124 = vmatprep.subr.mxu0 0.0
        %2125 = vmatpush1.msra.mxu0 %v2052
        %2126 = vmatprep.subr.mxu0 0.0
        %2127 = vmatpush1.msra.mxu0 %v2053
        %2128 = vmatprep.subr.mxu0 0.0
        %2129 = vmatpush1.msra.mxu0 %v2054
        %2130 = vmatprep.subr.mxu0 0.0
        %2131 = vmatpush1.msra.mxu0 %v2055
        %2132 = vmatprep.subr.mxu0 0.0
        %2133 = vmatpush1.msra.mxu0 %v2056
        %2134 = vmatprep.subr.mxu0 0.0
        %2135 = vmatpush1.msra.mxu0 %v2057
        %2136 = vmatprep.subr.mxu0 0.0
        %2137 = vmatpush1.msra.mxu0 %v2058
        %2138 = vmatprep.subr.mxu0 0.0
        %2139 = vmatpush1.msra.mxu0 %v2059
        %2140 = vmatprep.subr.mxu0 0.0
        %2141 = vmatpush1.msra.mxu0 %v2060
        %2142 = vmatprep.subr.mxu0 0.0
        %2143 = vmatpush1.msra.mxu0 0.0
        %2144 = vmatprep.subr.mxu0 0.0
        %2145 = vmatpush1.msra.mxu0 0.0
        %2146 = vmatprep.subr.mxu0 0.0
        %2147 = vmatpush1.msra.mxu0 0.0
        %2148 = vmatprep.subr.mxu0 0.0
        %2149 = vmatpush1.msra.mxu0 0.0
        %2150 = vmatprep.subr.mxu0 0.0
        %2151 = vmatpush1.msra.mxu0 0.0
        %2152 = vmatprep.subr.mxu0 0.0
        %2153 = vmatpush1.msra.mxu0 0.0
        %2154 = vmatprep.subr.mxu0 0.0
        %2155 = vmatpush1.msra.mxu0 0.0
        %2156 = vmatprep.subr.mxu0 0.0
        %2157 = vmatpush1.msra.mxu0 0.0
        %2158 = vmatprep.subr.mxu0 0.0
        %2159 = vmatpush1.msra.mxu0 0.0
        %2160 = vmatprep.subr.mxu0 0.0
        %2161 = vmatpush1.msra.mxu0 0.0
        %2162 = vmatprep.subr.mxu0 0.0
        %2163 = vmatpush1.msra.mxu0 0.0
        %2164 = vmatprep.subr.mxu0 0.0
        %2165 = vmatpush1.msra.mxu0 0.0
        %2166 = vmatprep.subr.mxu0 0.0
        %2167 = vmatpush1.msra.mxu0 0.0
        %2168 = vmatprep.subr.mxu0 0.0
        %2169 = vmatpush1.msra.mxu0 0.0
        %2170 = vmatprep.subr.mxu0 0.0
        %2171 = vmatpush1.msra.mxu0 0.0
        %2172 = vmatprep.subr.mxu0 0.0
        %2173 = vmatpush1.msra.mxu0 0.0
        %2174 = vmatprep.mubr.f32.mxu0 0.0
        %2175 = vmatmul.mubr.f32.gmra.mrb[0].mxu0 %v2008
        %v2176 = vpop.f32.mrb[0].mxu0
        %v2177 = vadd.f32 0.0, %v2176
        %v2178 = vpop.f32.mrb[0].mxu0
        %2179 = vmatprep.mubr.f32.mxu0 0.0
        %2180 = vmatmul.mubr.f32.gmra.mrb[0].mxu0 %v2009
        %v2181 = vpop.f32.mrb[0].mxu0
        %v2182 = vadd.f32 0.0, %v2181
        %v2183 = vpop.f32.mrb[0].mxu0
        %2184 = vmatprep.mubr.f32.mxu0 0.0
        %2185 = vmatmul.mubr.f32.gmra.mrb[0].mxu0 %v2010
        %v2186 = vpop.f32.mrb[0].mxu0
        %v2187 = vadd.f32 0.0, %v2186
        %v2188 = vpop.f32.mrb[0].mxu0
        %2189 = vmatprep.mubr.f32.mxu0 0.0
        %2190 = vmatmul.mubr.f32.gmra.mrb[0].mxu0 %v2011
        %v2191 = vpop.f32.mrb[0].mxu0
        %v2192 = vadd.f32 0.0, %v2191
        %v2193 = vpop.f32.mrb[0].mxu0
        %2194 = vdwg.mxu0
        %2195 = vmatprep.subr.mxu0 0.0
        %2196 = vmatpush1.msra.mxu0 %v2094
        %2197 = vmatprep.subr.mxu0 0.0
        %2198 = vmatpush1.msra.mxu0 %v2095
        %2199 = vmatprep.subr.mxu0 0.0
        %2200 = vmatpush1.msra.mxu0 %v2096
        %2201 = vmatprep.subr.mxu0 0.0
        %2202 = vmatpush1.msra.mxu0 %v2097
        %2203 = vmatprep.subr.mxu0 0.0
        %2204 = vmatpush1.msra.mxu0 %v2098
        %2205 = vmatprep.subr.mxu0 0.0
        %2206 = vmatpush1.msra.mxu0 %v2099
        %2207 = vmatprep.subr.mxu0 0.0
        %2208 = vmatpush1.msra.mxu0 %v2100
        %2209 = vmatprep.subr.mxu0 0.0
        %2210 = vmatpush1.msra.mxu0 %v2101
        %2211 = vmatprep.subr.mxu0 0.0
        %2212 = vmatpush1.msra.mxu0 %v2102
        %2213 = vmatprep.subr.mxu0 0.0
        %2214 = vmatpush1.msra.mxu0 %v2103
        %2215 = vmatprep.subr.mxu0 0.0
        %2216 = vmatpush1.msra.mxu0 %v2104
        %2217 = vmatprep.subr.mxu0 0.0
        %2218 = vmatpush1.msra.mxu0 %v2105
        %2219 = vmatprep.subr.mxu0 0.0
        %2220 = vmatpush1.msra.mxu0 %v2106
        %2221 = vmatprep.subr.mxu0 0.0
        %2222 = vmatpush1.msra.mxu0 %v2107
        %2223 = vmatprep.subr.mxu0 0.0
        %2224 = vmatpush1.msra.mxu0 %v2108
        %2225 = vmatprep.subr.mxu0 0.0
        %2226 = vmatpush1.msra.mxu0 %v2109
        %2227 = vmatprep.subr.mxu0 0.0
        %2228 = vmatpush1.msra.mxu0 0.0
        %2229 = vmatprep.subr.mxu0 0.0
        %2230 = vmatpush1.msra.mxu0 0.0
        %2231 = vmatprep.subr.mxu0 0.0
        %2232 = vmatpush1.msra.mxu0 0.0
        %2233 = vmatprep.subr.mxu0 0.0
        %2234 = vmatpush1.msra.mxu0 0.0
        %2235 = vmatprep.subr.mxu0 0.0
        %2236 = vmatpush1.msra.mxu0 0.0
        %2237 = vmatprep.subr.mxu0 0.0
        %2238 = vmatpush1.msra.mxu0 0.0
        %2239 = vmatprep.subr.mxu0 0.0
        %2240 = vmatpush1.msra.mxu0 0.0
        %2241 = vmatprep.subr.mxu0 0.0
        %2242 = vmatpush1.msra.mxu0 0.0
        %2243 = vmatprep.subr.mxu0 0.0
        %2244 = vmatpush1.msra.mxu0 0.0
        %2245 = vmatprep.subr.mxu0 0.0
        %2246 = vmatpush1.msra.mxu0 0.0
        %2247 = vmatprep.subr.mxu0 0.0
        %2248 = vmatpush1.msra.mxu0 0.0
        %2249 = vmatprep.subr.mxu0 0.0
        %2250 = vmatpush1.msra.mxu0 0.0
        %2251 = vmatprep.subr.mxu0 0.0
        %2252 = vmatpush1.msra.mxu0 0.0
        %2253 = vmatprep.subr.mxu0 0.0
        %2254 = vmatpush1.msra.mxu0 0.0
        %2255 = vmatprep.subr.mxu0 0.0
        %2256 = vmatpush1.msra.mxu0 0.0
        %2257 = vmatprep.subr.mxu0 0.0
        %2258 = vmatpush1.msra.mxu0 0.0
        %2259 = vmatprep.mubr.f32.mxu0 0.0
        %2260 = vmatmul.mubr.f32.gmra.mrb[0].mxu0 %v2008
        %v2261 = vpop.f32.mrb[0].mxu0
        %v2262 = vadd.f32 0.0, %v2261
        %v2263 = vpop.f32.mrb[0].mxu0
        %2264 = vmatprep.mubr.f32.mxu0 0.0
        %2265 = vmatmul.mubr.f32.gmra.mrb[0].mxu0 %v2009
        %v2266 = vpop.f32.mrb[0].mxu0
        %v2267 = vadd.f32 0.0, %v2266
        %v2268 = vpop.f32.mrb[0].mxu0
        %2269 = vmatprep.mubr.f32.mxu0 0.0
        %2270 = vmatmul.mubr.f32.gmra.mrb[0].mxu0 %v2010
        %v2271 = vpop.f32.mrb[0].mxu0
        %v2272 = vadd.f32 0.0, %v2271
        %v2273 = vpop.f32.mrb[0].mxu0
        %2274 = vmatprep.mubr.f32.mxu0 0.0
        %2275 = vmatmul.mubr.f32.gmra.mrb[0].mxu0 %v2011
        %v2276 = vpop.f32.mrb[0].mxu0
        %v2277 = vadd.f32 0.0, %v2276
        %v2278 = vpop.f32.mrb[0].mxu0
        %2279 = vdwg.mxu0
        %v2280 = vmax.f32 %v2177, %v2262
        %v2281 = vmax.f32 %v2182, %v2267
        %v2282 = vmax.f32 %v2187, %v2272
        %v2283 = vmax.f32 %v2192, %v2277
        %vm2284 = vcmask 523264
        %2285 = vst.msk [vmem:[%s433] sm:$0xff] %vm2284, %v2280
        %2286 = vst.msk [vmem:[%s433 + $0x8] sm:$0xff] %vm2284, %v2281
        %2287 = vst.msk [vmem:[%s433 + $0x10] sm:$0xff] %vm2284, %v2282
        %2288 = vst.msk [vmem:[%s433 + $0x18] sm:$0xff] %vm2284, %v2283
        %s2289 = sand.u32 %s313, 1
        %s2290 = scalar_lea.sflag [#allocation3], %s2289
        %s2291 = sand.u32 %s313, 1
        %s2292 = smul.addr %s2291, 32
        %s2293 = scalar_lea.vmem [#allocation2], %s2292
        // Predicated region
        $region73: #{tpu_custom_call.1} parent=71 // pred_check
          %p2294 = pneg %p323
        $region74: #{tpu_custom_call.1} parent=71 // pred_check_branch
          %2296 = sbr.rel (%p2294) target = $region76
        $region75: #{tpu_custom_call.1} parent=71 // pred_region
          %s2298 = ssub.s32 512, 512
          %2299 = vsyncadd %s2290, %s2298
          %s2300 = smul.addr %s27, 4
          %s2301 = smul.addr %s2300, 128
          %s2302 = scalar_lea.hbm %s13, %s2301
          %s2303 = sshll.u32 %s2293, 4
          %s2304 = int_to_ptr.vmem [resolvable:$true] %s2303
          %2309 = dma.vmem_to_hbm [thread:$0]  %s2304, 512, %s2302, %s2290, 128, 128, 8
        $region76: #{tpu_custom_call.1} parent=71 // pred_fallthru
          _
      $region72: #{tpu_custom_call.1} parent=5 // pred_fallthru
        _
      %p2310 = scmp.le.s32.totalorder 2, %s22
      // Predicated region
      $region77: #{tpu_custom_call.1} parent=5 // pred_check
        %p2311 = pneg %p2310
      $region78: #{tpu_custom_call.1} parent=5 // pred_check_branch
        %2313 = sbr.rel (%p2311) target = $region80
      $region79: #{tpu_custom_call.1} parent=5 // pred_region
        %s2314 = ssub.s32 %s22, 2
        // Predicated region
        $region81: #{tpu_custom_call.1} parent=79 // pred_check
          %p2315 = pneg %p329
        $region82: #{tpu_custom_call.1} parent=79 // pred_check_branch
          %2317 = sbr.rel (%p2315) target = $region84
        $region83: #{tpu_custom_call.1} parent=79 // pred_region
          %s2318 = sand.u32 %s314, 1
          %s2319 = scalar_lea.sflag [#allocation3], %s2318
          %s2320 = sand.u32 %s314, 1
          %s2321 = smul.addr %s2320, 32
          %s2322 = scalar_lea.vmem [#allocation2], %s2321
          %2323 = dma.done %s2319, 512
        $region84: #{tpu_custom_call.1} parent=79 // pred_fallthru
          _
      $region80: #{tpu_custom_call.1} parent=5 // pred_fallthru
        _
    $region6: #{tpu_custom_call.1} parent=1 // loop_footer
      %s26 = sadd.s32 1, %s22
    $region7: #{tpu_custom_call.1} parent=1 // loop_footer_branch
      %21 = sbr.rel target = $region3
    $region8: #{tpu_custom_call.1} parent=1 // loop_exit
      _
    %2324 = vsyncpa [#allocation3], 1
    %s2325 = scalar_lea.sflag [#allocation3], 1
    %2326 = vsyncpa %s2325, 1

</llo_original>
